<compile_context>
chip_gen: v5e
topology: v5e:2x2
jax: 0.10.0
libtpu: 0.0.40
codegen_flags: <defaults>
</compile_context>

<pallas_src>
import functools

import jax
import jax.numpy as jnp
from jax.experimental import pallas as pl
from jax.experimental.pallas import tpu as pltpu


def _round_up(x, m):
    return ((x + m - 1) // m) * m


# ---------------------------------------------------------------------------
# Fused kernel: whole TCN for a tile of B batch elements
# ---------------------------------------------------------------------------
def fused_tcn_kernel(*refs, meta, pad, L, B):
    """refs = (x_ref, *weight_refs, o_ref, buf_a, buf_h).

    meta: per layer (K, dilation, use_downsample, cin_pad, cout_pad) (static).
    pad:  sublane-aligned causal halo (>= max shift over all layers).
    L:    padded sequence length.  B: batch-tile size.
    """
    x_ref = refs[0]
    o_ref = refs[-3]
    buf_a = refs[-2]          # (B, pad+L, Cmax) f32 : layer input  (+ halo)
    buf_h = refs[-1]          # (B, pad+L, Cmax) bf16: block hidden (+ halo)
    w_refs = refs[1:-3]

    f32 = jnp.float32
    bf16 = jnp.bfloat16
    Cmax = buf_a.shape[-1]

    # Zero the causal halos once; rows [0, pad) are never written again.
    buf_a[:, pl.ds(0, pad), :] = jnp.zeros((B, pad, Cmax), f32)
    buf_h[:, pl.ds(0, pad), :] = jnp.zeros((B, pad, Cmax), bf16)

    # Load the (channel-padded, bf16) input into the resident f32 buffer.
    c0 = x_ref.shape[-1]
    buf_a[:, pl.ds(pad, L), :c0] = x_ref[...].astype(f32)

    def causal_conv(src_buf, cin, cout, K, dil, w_ref, b_ref, src_is_bf16):
        # y[t] = sum_k x[t-(K-1-k)*dil] @ w[k] + b   (causal, zero left-pad).
        # K taps concatenated lane-wise -> ONE (K*cin)-deep MXU contraction.
        taps = []
        for k in range(K):                      # K is tiny and static
            s = (K - 1 - k) * dil
            t = src_buf[:, pl.ds(pad - s, L), :cin]
            taps.append(t if src_is_bf16 else t.astype(bf16))
        lhs = taps[0] if K == 1 else jnp.concatenate(taps, axis=-1)
        y = jnp.dot(lhs.reshape(B * L, K * cin), w_ref[...],
                    preferred_element_type=f32)
        return y + b_ref[...]                   # (B*L, cout); (1, cout) bcasts

    wi = 0
    n_layers = len(meta)
    for li, (K, dil, use_ds, cin, cout) in enumerate(meta):
        w1, b1, w2, b2 = w_refs[wi:wi + 4]
        wi += 4
        if use_ds:
            wd, bd = w_refs[wi:wi + 2]
            wi += 2

        # conv1 -> chomp -> relu (dropout identity in eval); hidden kept bf16.
        h = jnp.maximum(causal_conv(buf_a, cin, cout, K, dil, w1, b1, False),
                        0.0)
        buf_h[:, pl.ds(pad, L), :cout] = h.astype(bf16).reshape(B, L, cout)

        # conv2 -> chomp -> relu (MXU fed directly from the bf16 buffer).
        out = jnp.maximum(causal_conv(buf_h, cout, cout, K, dil, w2, b2, True),
                          0.0)

        # Residual branch (1x1 conv iff real Cin != real Cout).  Read late so
        # the f32 (B*L, cin) slab is not live across both convs.
        x_rows = buf_a[:, pl.ds(pad, L), :cin].reshape(B * L, cin)
        if use_ds:
            res = jnp.dot(x_rows.astype(bf16), wd[...],
                          preferred_element_type=f32) + bd[...]
        else:
            res = x_rows

        y = jnp.maximum(out + res, 0.0)
        if li == n_layers - 1:
            o_ref[...] = y.reshape(B, L, cout).astype(o_ref.dtype)
        else:
            buf_a[:, pl.ds(pad, L), :cout] = y.reshape(B, L, cout)


# ---------------------------------------------------------------------------
# Wrapper: whole TCN in one pallas_call (grid over batch tiles)
# ---------------------------------------------------------------------------
def tcn_forward(x_nlc, params):
    """x_nlc: (N, L, C_in) channels-last float32. Returns (N, L, C_last) f32."""
    N, L, c_in = x_nlc.shape
    assert len(params) >= 1

    L_pad = _round_up(L, 8)
    # Per-layer lane-dense channel padding (multiple of 128).
    c_real = [c_in] + [int(p["w1"].shape[2]) for p in params]
    c_pad = [_round_up(max(c, 1), 128) for c in c_real]
    Cmax = max(c_pad)

    max_shift = max((int(p["w1"].shape[0]) - 1) * int(p["dilation"])
                    for p in params)
    PAD = _round_up(max(max_shift, 1), 16)   # halo aligned for f32 and bf16

    # Constant index_map across the grid -> a single VMEM buffer suffices.
    w_pipe = pl.Buffered(1)

    # ---- VMEM budgeting (generation aware) --------------------------------
    w_bytes = 0
    for li, p in enumerate(params):
        K = int(p["w1"].shape[0])
        ci, co = c_pad[li], c_pad[li + 1]
        w_bytes += K * ci * co * 2 + co * 4 + K * co * co * 2 + co * 4
        if p["wd"] is not None:
            w_bytes += ci * co * 2 + co * 4

    def vmem_needed(bt):
        in_b = bt * L_pad * c_pad[0] * 2                # bf16 input tile
        out_b = bt * L_pad * c_pad[-1] * 4              # f32 output tile
        scr = bt * (PAD + L_pad) * Cmax * (4 + 2)       # f32 buf_a + bf16 buf_h
        tmp = 6 * bt * L_pad * Cmax * 4                 # in-kernel temporaries
        return 2 * in_b + 2 * out_b + scr + tmp + w_bytes + (2 << 20)

    try:
        cap = int(0.75 * int(pltpu.get_tpu_info().vmem_capacity_bytes))
    except Exception:  # conservative fallback: v7x per-core VMEM
        cap = int(0.75 * (64 << 20))

    # Batch-tile size: amortize per-grid-step overhead when L is small.
    B_t = max(1, min(N, 512 // max(L_pad, 1)))
    while B_t > 1 and vmem_needed(B_t) > cap:
        B_t //= 2
    needed = vmem_needed(B_t)
    if needed > cap:
        # TODO(synk): add an L-tile grid axis with a receptive-field halo so
        # long sequences fit (notably v7x's 64 MiB VMEM).
        raise ValueError(
            f"TCN tile needs ~{needed >> 20} MiB VMEM but cap is "
            f"{cap >> 20} MiB; L-tiling not implemented yet")
    vmem_limit = int(min(max(needed, 16 << 20), cap))

    N_pad = _round_up(N, B_t)

    # bf16, zero-padded input (extra batch rows / time rows / channel lanes
    # are zeros and are either causally harmless or sliced off).
    x_p = jnp.zeros((N_pad, L_pad, c_pad[0]), jnp.bfloat16)
    x_p = x_p.at[:N, :L, :c_in].set(x_nlc.astype(jnp.bfloat16))

    args = [x_p]
    in_specs = [pl.BlockSpec((B_t, L_pad, c_pad[0]), lambda n: (n, 0, 0))]
    meta = []
    for li, p in enumerate(params):
        K = int(p["w1"].shape[0])
        cin_r, cout_r = int(p["w1"].shape[1]), int(p["w1"].shape[2])
        ci, co = c_pad[li], c_pad[li + 1]
        use_ds = p["wd"] is not None

        # Conv weights zero-padded per layer, bf16, pre-reshaped so the K taps
        # fold into ONE (K*Cin_pad)-deep contraction.  Biases f32.
        w1 = jnp.zeros((K, ci, co), jnp.bfloat16)
        w1 = w1.at[:, :cin_r, :cout_r].set(p["w1"].astype(jnp.bfloat16))
        w1 = w1.reshape(K * ci, co)
        b1 = jnp.zeros((1, co), jnp.float32).at[:, :cout_r].set(p["b1"])
        w2 = jnp.zeros((K, co, co), jnp.bfloat16)
        w2 = w2.at[:, :cout_r, :cout_r].set(p["w2"].astype(jnp.bfloat16))
        w2 = w2.reshape(K * co, co)
        b2 = jnp.zeros((1, co), jnp.float32).at[:, :cout_r].set(p["b2"])

        args += [w1, b1, w2, b2]
        in_specs += [
            pl.BlockSpec((K * ci, co), lambda n: (0, 0), pipeline_mode=w_pipe),
            pl.BlockSpec((1, co), lambda n: (0, 0), pipeline_mode=w_pipe),
            pl.BlockSpec((K * co, co), lambda n: (0, 0), pipeline_mode=w_pipe),
            pl.BlockSpec((1, co), lambda n: (0, 0), pipeline_mode=w_pipe),
        ]
        if use_ds:
            wd = jnp.zeros((ci, co), jnp.bfloat16)
            wd = wd.at[:cin_r, :cout_r].set(p["wd"].astype(jnp.bfloat16))
            bd = jnp.zeros((1, co), jnp.float32).at[:, :cout_r].set(p["bd"])
            args += [wd, bd]
            in_specs += [
                pl.BlockSpec((ci, co), lambda n: (0, 0), pipeline_mode=w_pipe),
                pl.BlockSpec((1, co), lambda n: (0, 0), pipeline_mode=w_pipe),
            ]
        meta.append((K, int(p["dilation"]), bool(use_ds), ci, co))

    kernel = functools.partial(fused_tcn_kernel, meta=tuple(meta),
                               pad=PAD, L=L_pad, B=B_t)

    out = pl.pallas_call(
        kernel,
        out_shape=jax.ShapeDtypeStruct((N_pad, L_pad, c_pad[-1]), jnp.float32),
        grid=(N_pad // B_t,),
        in_specs=in_specs,
        out_specs=pl.BlockSpec((B_t, L_pad, c_pad[-1]), lambda n: (n, 0, 0)),
        scratch_shapes=[
            pltpu.VMEM((B_t, PAD + L_pad, Cmax), jnp.float32),
            pltpu.VMEM((B_t, PAD + L_pad, Cmax), jnp.bfloat16),
        ],
        compiler_params=pltpu.CompilerParams(
            dimension_semantics=("parallel",),
            vmem_limit_bytes=vmem_limit),
    )(*args)

    return out[:N, :L, :c_real[-1]]


# ---------------------------------------------------------------------------
# Deterministic parameter init (matches module shapes; synthetic values)
# ---------------------------------------------------------------------------
def init_tcn_params(key, num_inputs, num_channels, kernel_size):
    params = []
    in_c = num_inputs
    for i, out_c in enumerate(num_channels):
        key, *ks = jax.random.split(key, 7)
        dilation = 2 ** i
        p = {
            "dilation": dilation,
            # conv weights ~ N(0, 0.01) as in init_weights()
            "w1": 0.01 * jax.random.normal(ks[0], (kernel_size, in_c, out_c),
                                           jnp.float32),
            "b1": 0.01 * jax.random.normal(ks[1], (1, out_c), jnp.float32),
            "w2": 0.01 * jax.random.normal(ks[2], (kernel_size, out_c, out_c),
                                           jnp.float32),
            "b2": 0.01 * jax.random.normal(ks[3], (1, out_c), jnp.float32),
        }
        if in_c != out_c:
            p["wd"] = 0.01 * jax.random.normal(ks[4], (in_c, out_c),
                                               jnp.float32)
            p["bd"] = 0.01 * jax.random.normal(ks[5], (1, out_c), jnp.float32)
        else:
            p["wd"] = None
            p["bd"] = None
        params.append(p)
        in_c = out_c
    return params


# ---------------------------------------------------------------------------
# Pure-JAX reference (bf16 matmul inputs, f32 accumulation — same as kernel)
# ---------------------------------------------------------------------------
def _ref_causal_conv(x, w, b, dil):
    N, L, _ = x.shape
    K = w.shape[0]
    pad = (K - 1) * dil
    xp = jnp.pad(x, ((0, 0), (pad, 0), (0, 0)))
    acc = jnp.zeros((N, L, w.shape[2]), jnp.float32)
    for k in range(K):
        acc = acc + jnp.einsum(
            "nlc,co->nlo",
            xp[:, k * dil:k * dil + L, :].astype(jnp.bfloat16),
            w[k].astype(jnp.bfloat16),
            preferred_element_type=jnp.float32)
    return acc + b[None]


def tcn_reference(x_nlc, params):
    h = x_nlc.astype(jnp.float32)
    for p in params:
        h1 = jax.nn.relu(_ref_causal_conv(h, p["w1"], p["b1"], p["dilation"]))
        out = jax.nn.relu(_ref_causal_conv(h1, p["w2"], p["b2"], p["dilation"]))
        if p["wd"] is None:
            res = h
        else:
            res = jnp.einsum("nlc,co->nlo",
                             h.astype(jnp.bfloat16),
                             p["wd"].astype(jnp.bfloat16),
                             preferred_element_type=jnp.float32) + p["bd"][None]
        h = jax.nn.relu(out + res)
    return h


# ---------------------------------------------------------------------------
if __name__ == "__main__":
    key = jax.random.PRNGKey(0)
    k_x, k_p = jax.random.split(key)

    # PyTorch-style input: NCL = (batch, num_inputs, seq_len)
    N, C_IN, L = 2, 4, 16
    NUM_CHANNELS = [8, 8]      # second block exercises the no-downsample path
    KERNEL_SIZE = 2

    x_ncl = jax.random.normal(k_x, (N, C_IN, L), jnp.float32)
    x_nlc = jnp.transpose(x_ncl, (0, 2, 1))          # kernel layout (N, L, C)

    params = init_tcn_params(k_p, C_IN, NUM_CHANNELS, KERNEL_SIZE)

    y_nlc = tcn_forward(x_nlc, params)
    y_nlc = jax.block_until_ready(y_nlc)

    y_ref = tcn_reference(x_nlc, params)
    assert y_nlc.shape == (N, L, NUM_CHANNELS[-1])
    # bf16 matmul inputs in both paths; tolerance covers f32 accumulation-order
    # (fused K-tap contraction) and bf16 rounding-boundary differences.
    assert jnp.allclose(y_nlc, y_ref, rtol=5e-3, atol=1e-4), "mismatch vs ref"

    # back to PyTorch NCL convention: (N, num_channels[-1], L)
    y_ncl = jnp.transpose(y_nlc, (0, 2, 1))
    assert y_ncl.shape == (N, NUM_CHANNELS[-1], L)

    print("KERNEL_OK")
</pallas_src>

<mosaic_0001>
module attributes {stable_mosaic.version = 11 : i64} {
  func.func @fused_tcn_kernel(%arg0: i32, %arg1: memref<2x16x128xbf16, #tpu.memory_space<vmem>>, %arg2: memref<256x128xbf16, #tpu.memory_space<vmem>>, %arg3: memref<1x128xf32, #tpu.memory_space<vmem>>, %arg4: memref<256x128xbf16, #tpu.memory_space<vmem>>, %arg5: memref<1x128xf32, #tpu.memory_space<vmem>>, %arg6: memref<128x128xbf16, #tpu.memory_space<vmem>>, %arg7: memref<1x128xf32, #tpu.memory_space<vmem>>, %arg8: memref<256x128xbf16, #tpu.memory_space<vmem>>, %arg9: memref<1x128xf32, #tpu.memory_space<vmem>>, %arg10: memref<256x128xbf16, #tpu.memory_space<vmem>>, %arg11: memref<1x128xf32, #tpu.memory_space<vmem>>, %arg12: memref<2x16x128xf32, #tpu.memory_space<vmem>>, %arg13: memref<2x32x128xf32, #tpu.memory_space<vmem>>, %arg14: memref<2x32x128xbf16, #tpu.memory_space<vmem>>) attributes {dimension_semantics = [#tpu.dimension_semantics<parallel>], iteration_bounds = array<i64: 1>, scalar_prefetch = 0 : i64, scratch_operands = 2 : i64, tpu.core_type = #tpu.core_type<tc>, window_params = [{transform_indices = @transform_0, window_bounds = array<i64: 2, 16, 128>}, {pipeline_mode = #tpu.pipeline_mode<synchronous>, transform_indices = @transform_1, window_bounds = array<i64: 256, 128>}, {pipeline_mode = #tpu.pipeline_mode<synchronous>, transform_indices = @transform_2, window_bounds = array<i64: 1, 128>}, {pipeline_mode = #tpu.pipeline_mode<synchronous>, transform_indices = @transform_3, window_bounds = array<i64: 256, 128>}, {pipeline_mode = #tpu.pipeline_mode<synchronous>, transform_indices = @transform_4, window_bounds = array<i64: 1, 128>}, {pipeline_mode = #tpu.pipeline_mode<synchronous>, transform_indices = @transform_5, window_bounds = array<i64: 128, 128>}, {pipeline_mode = #tpu.pipeline_mode<synchronous>, transform_indices = @transform_6, window_bounds = array<i64: 1, 128>}, {pipeline_mode = #tpu.pipeline_mode<synchronous>, transform_indices = @transform_7, window_bounds = array<i64: 256, 128>}, {pipeline_mode = #tpu.pipeline_mode<synchronous>, transform_indices = @transform_8, window_bounds = array<i64: 1, 128>}, {pipeline_mode = #tpu.pipeline_mode<synchronous>, transform_indices = @transform_9, window_bounds = array<i64: 256, 128>}, {pipeline_mode = #tpu.pipeline_mode<synchronous>, transform_indices = @transform_10, window_bounds = array<i64: 1, 128>}, {transform_indices = @transform_11, window_bounds = array<i64: 2, 16, 128>}]} {
    %cst = arith.constant 0.000000e+00 : f32
    %0 = vector.broadcast %cst : f32 to vector<2x16x128xf32>
    %c0 = arith.constant 0 : index
    %c0_0 = arith.constant 0 : index
    %c0_1 = arith.constant 0 : index
    %1 = vector.load %arg13[%c0, %c0_0, %c0_1] : memref<2x32x128xf32, #tpu.memory_space<vmem>>, vector<2x16x128xf32>
    tpu.vector_store %arg13[%c0, %c0_0, %c0_1], %0 {strides = array<i32>} : memref<2x32x128xf32, #tpu.memory_space<vmem>>, vector<2x16x128xf32>,
    %cst_2 = arith.constant 0.000000e+00 : bf16
    %2 = vector.broadcast %cst_2 : bf16 to vector<2x16x128xbf16>
    %c0_3 = arith.constant 0 : index
    %c0_4 = arith.constant 0 : index
    %c0_5 = arith.constant 0 : index
    %3 = vector.load %arg14[%c0_3, %c0_4, %c0_5] : memref<2x32x128xbf16, #tpu.memory_space<vmem>>, vector<2x16x128xbf16>
    tpu.vector_store %arg14[%c0_3, %c0_4, %c0_5], %2 {strides = array<i32>} : memref<2x32x128xbf16, #tpu.memory_space<vmem>>, vector<2x16x128xbf16>,
    %c0_6 = arith.constant 0 : index
    %c0_7 = arith.constant 0 : index
    %c0_8 = arith.constant 0 : index
    %4 = vector.load %arg1[%c0_6, %c0_7, %c0_8] : memref<2x16x128xbf16, #tpu.memory_space<vmem>>, vector<2x16x128xbf16>
    %5 = arith.extf %4 : vector<2x16x128xbf16> to vector<2x16x128xf32>
    %c0_9 = arith.constant 0 : index
    %c16 = arith.constant 16 : index
    %c0_10 = arith.constant 0 : index
    %6 = vector.load %arg13[%c0_9, %c16, %c0_10] : memref<2x32x128xf32, #tpu.memory_space<vmem>>, vector<2x16x128xf32>
    tpu.vector_store %arg13[%c0_9, %c16, %c0_10], %5 {strides = array<i32>} : memref<2x32x128xf32, #tpu.memory_space<vmem>>, vector<2x16x128xf32>,
    %c0_11 = arith.constant 0 : index
    %c15 = arith.constant 15 : index
    %c0_12 = arith.constant 0 : index
    %7 = vector.load %arg13[%c0_11, %c15, %c0_12] : memref<2x32x128xf32, #tpu.memory_space<vmem>>, vector<2x16x128xf32>
    %8 = arith.truncf %7 : vector<2x16x128xf32> to vector<2x16x128xbf16>
    %c0_13 = arith.constant 0 : index
    %c16_14 = arith.constant 16 : index
    %c0_15 = arith.constant 0 : index
    %9 = vector.load %arg13[%c0_13, %c16_14, %c0_15] : memref<2x32x128xf32, #tpu.memory_space<vmem>>, vector<2x16x128xf32>
    %10 = arith.truncf %9 : vector<2x16x128xf32> to vector<2x16x128xbf16>
    %11 = tpu.concatenate %8, %10 in 2 : vector<2x16x128xbf16>, vector<2x16x128xbf16> -> vector<2x16x256xbf16>
    %12 = vector.shape_cast %11 : vector<2x16x256xbf16> to vector<32x256xbf16>
    %c0_16 = arith.constant 0 : index
    %c0_17 = arith.constant 0 : index
    %13 = vector.load %arg2[%c0_16, %c0_17] : memref<256x128xbf16, #tpu.memory_space<vmem>>, vector<256x128xbf16>
    %cst_18 = arith.constant dense<0.000000e+00> : vector<32x128xf32>
    %14 = tpu.matmul %12, %13, %cst_18 {dimension_numbers = #tpu.dot_dimension_numbers<[1], [0], [0], [1], [0, 0, 1, 1], [], []>} : vector<32x256xbf16>, vector<256x128xbf16>, vector<32x128xf32> -> vector<32x128xf32>
    %c0_19 = arith.constant 0 : index
    %c0_20 = arith.constant 0 : index
    %15 = vector.load %arg3[%c0_19, %c0_20] : memref<1x128xf32, #tpu.memory_space<vmem>>, vector<1x128xf32>
    %16 = vector.broadcast %15 : vector<1x128xf32> to vector<32x128xf32>
    %17 = arith.addf %14, %16 : vector<32x128xf32>
    %cst_21 = arith.constant 0.000000e+00 : f32
    %18 = vector.broadcast %cst_21 : f32 to vector<32x128xf32>
    %19 = arith.maximumf %17, %18 : vector<32x128xf32>
    %20 = arith.truncf %19 : vector<32x128xf32> to vector<32x128xbf16>
    %21 = vector.shape_cast %20 : vector<32x128xbf16> to vector<2x16x128xbf16>
    %c0_22 = arith.constant 0 : index
    %c16_23 = arith.constant 16 : index
    %c0_24 = arith.constant 0 : index
    %22 = vector.load %arg14[%c0_22, %c16_23, %c0_24] : memref<2x32x128xbf16, #tpu.memory_space<vmem>>, vector<2x16x128xbf16>
    tpu.vector_store %arg14[%c0_22, %c16_23, %c0_24], %21 {strides = array<i32>} : memref<2x32x128xbf16, #tpu.memory_space<vmem>>, vector<2x16x128xbf16>,
    %c0_25 = arith.constant 0 : index
    %c15_26 = arith.constant 15 : index
    %c0_27 = arith.constant 0 : index
    %23 = vector.load %arg14[%c0_25, %c15_26, %c0_27] : memref<2x32x128xbf16, #tpu.memory_space<vmem>>, vector<2x16x128xbf16>
    %c0_28 = arith.constant 0 : index
    %c16_29 = arith.constant 16 : index
    %c0_30 = arith.constant 0 : index
    %24 = vector.load %arg14[%c0_28, %c16_29, %c0_30] : memref<2x32x128xbf16, #tpu.memory_space<vmem>>, vector<2x16x128xbf16>
    %25 = tpu.concatenate %23, %24 in 2 : vector<2x16x128xbf16>, vector<2x16x128xbf16> -> vector<2x16x256xbf16>
    %26 = vector.shape_cast %25 : vector<2x16x256xbf16> to vector<32x256xbf16>
    %c0_31 = arith.constant 0 : index
    %c0_32 = arith.constant 0 : index
    %27 = vector.load %arg4[%c0_31, %c0_32] : memref<256x128xbf16, #tpu.memory_space<vmem>>, vector<256x128xbf16>
    %cst_33 = arith.constant dense<0.000000e+00> : vector<32x128xf32>
    %28 = tpu.matmul %26, %27, %cst_33 {dimension_numbers = #tpu.dot_dimension_numbers<[1], [0], [0], [1], [0, 0, 1, 1], [], []>} : vector<32x256xbf16>, vector<256x128xbf16>, vector<32x128xf32> -> vector<32x128xf32>
    %c0_34 = arith.constant 0 : index
    %c0_35 = arith.constant 0 : index
    %29 = vector.load %arg5[%c0_34, %c0_35] : memref<1x128xf32, #tpu.memory_space<vmem>>, vector<1x128xf32>
    %30 = vector.broadcast %29 : vector<1x128xf32> to vector<32x128xf32>
    %31 = arith.addf %28, %30 : vector<32x128xf32>
    %cst_36 = arith.constant 0.000000e+00 : f32
    %32 = vector.broadcast %cst_36 : f32 to vector<32x128xf32>
    %33 = arith.maximumf %31, %32 : vector<32x128xf32>
    %c0_37 = arith.constant 0 : index
    %c16_38 = arith.constant 16 : index
    %c0_39 = arith.constant 0 : index
    %34 = vector.load %arg13[%c0_37, %c16_38, %c0_39] : memref<2x32x128xf32, #tpu.memory_space<vmem>>, vector<2x16x128xf32>
    %35 = vector.shape_cast %34 : vector<2x16x128xf32> to vector<32x128xf32>
    %36 = arith.truncf %35 : vector<32x128xf32> to vector<32x128xbf16>
    %c0_40 = arith.constant 0 : index
    %c0_41 = arith.constant 0 : index
    %37 = vector.load %arg6[%c0_40, %c0_41] : memref<128x128xbf16, #tpu.memory_space<vmem>>, vector<128x128xbf16>
    %cst_42 = arith.constant dense<0.000000e+00> : vector<32x128xf32>
    %38 = tpu.matmul %36, %37, %cst_42 {dimension_numbers = #tpu.dot_dimension_numbers<[1], [0], [0], [1], [0, 0, 1, 1], [], []>} : vector<32x128xbf16>, vector<128x128xbf16>, vector<32x128xf32> -> vector<32x128xf32>
    %c0_43 = arith.constant 0 : index
    %c0_44 = arith.constant 0 : index
    %39 = vector.load %arg7[%c0_43, %c0_44] : memref<1x128xf32, #tpu.memory_space<vmem>>, vector<1x128xf32>
    %40 = vector.broadcast %39 : vector<1x128xf32> to vector<32x128xf32>
    %41 = arith.addf %38, %40 : vector<32x128xf32>
    %42 = arith.addf %33, %41 : vector<32x128xf32>
    %cst_45 = arith.constant 0.000000e+00 : f32
    %43 = vector.broadcast %cst_45 : f32 to vector<32x128xf32>
    %44 = arith.maximumf %42, %43 : vector<32x128xf32>
    %45 = vector.shape_cast %44 : vector<32x128xf32> to vector<2x16x128xf32>
    %c0_46 = arith.constant 0 : index
    %c16_47 = arith.constant 16 : index
    %c0_48 = arith.constant 0 : index
    %46 = vector.load %arg13[%c0_46, %c16_47, %c0_48] : memref<2x32x128xf32, #tpu.memory_space<vmem>>, vector<2x16x128xf32>
    tpu.vector_store %arg13[%c0_46, %c16_47, %c0_48], %45 {strides = array<i32>} : memref<2x32x128xf32, #tpu.memory_space<vmem>>, vector<2x16x128xf32>,
    %c0_49 = arith.constant 0 : index
    %c14 = arith.constant 14 : index
    %c0_50 = arith.constant 0 : index
    %47 = vector.load %arg13[%c0_49, %c14, %c0_50] : memref<2x32x128xf32, #tpu.memory_space<vmem>>, vector<2x16x128xf32>
    %48 = arith.truncf %47 : vector<2x16x128xf32> to vector<2x16x128xbf16>
    %c0_51 = arith.constant 0 : index
    %c16_52 = arith.constant 16 : index
    %c0_53 = arith.constant 0 : index
    %49 = vector.load %arg13[%c0_51, %c16_52, %c0_53] : memref<2x32x128xf32, #tpu.memory_space<vmem>>, vector<2x16x128xf32>
    %50 = arith.truncf %49 : vector<2x16x128xf32> to vector<2x16x128xbf16>
    %51 = tpu.concatenate %48, %50 in 2 : vector<2x16x128xbf16>, vector<2x16x128xbf16> -> vector<2x16x256xbf16>
    %52 = vector.shape_cast %51 : vector<2x16x256xbf16> to vector<32x256xbf16>
    %c0_54 = arith.constant 0 : index
    %c0_55 = arith.constant 0 : index
    %53 = vector.load %arg8[%c0_54, %c0_55] : memref<256x128xbf16, #tpu.memory_space<vmem>>, vector<256x128xbf16>
    %cst_56 = arith.constant dense<0.000000e+00> : vector<32x128xf32>
    %54 = tpu.matmul %52, %53, %cst_56 {dimension_numbers = #tpu.dot_dimension_numbers<[1], [0], [0], [1], [0, 0, 1, 1], [], []>} : vector<32x256xbf16>, vector<256x128xbf16>, vector<32x128xf32> -> vector<32x128xf32>
    %c0_57 = arith.constant 0 : index
    %c0_58 = arith.constant 0 : index
    %55 = vector.load %arg9[%c0_57, %c0_58] : memref<1x128xf32, #tpu.memory_space<vmem>>, vector<1x128xf32>
    %56 = vector.broadcast %55 : vector<1x128xf32> to vector<32x128xf32>
    %57 = arith.addf %54, %56 : vector<32x128xf32>
    %cst_59 = arith.constant 0.000000e+00 : f32
    %58 = vector.broadcast %cst_59 : f32 to vector<32x128xf32>
    %59 = arith.maximumf %57, %58 : vector<32x128xf32>
    %60 = arith.truncf %59 : vector<32x128xf32> to vector<32x128xbf16>
    %61 = vector.shape_cast %60 : vector<32x128xbf16> to vector<2x16x128xbf16>
    %c0_60 = arith.constant 0 : index
    %c16_61 = arith.constant 16 : index
    %c0_62 = arith.constant 0 : index
    %62 = vector.load %arg14[%c0_60, %c16_61, %c0_62] : memref<2x32x128xbf16, #tpu.memory_space<vmem>>, vector<2x16x128xbf16>
    tpu.vector_store %arg14[%c0_60, %c16_61, %c0_62], %61 {strides = array<i32>} : memref<2x32x128xbf16, #tpu.memory_space<vmem>>, vector<2x16x128xbf16>,
    %c0_63 = arith.constant 0 : index
    %c14_64 = arith.constant 14 : index
    %c0_65 = arith.constant 0 : index
    %63 = vector.load %arg14[%c0_63, %c14_64, %c0_65] : memref<2x32x128xbf16, #tpu.memory_space<vmem>>, vector<2x16x128xbf16>
    %c0_66 = arith.constant 0 : index
    %c16_67 = arith.constant 16 : index
    %c0_68 = arith.constant 0 : index
    %64 = vector.load %arg14[%c0_66, %c16_67, %c0_68] : memref<2x32x128xbf16, #tpu.memory_space<vmem>>, vector<2x16x128xbf16>
    %65 = tpu.concatenate %63, %64 in 2 : vector<2x16x128xbf16>, vector<2x16x128xbf16> -> vector<2x16x256xbf16>
    %66 = vector.shape_cast %65 : vector<2x16x256xbf16> to vector<32x256xbf16>
    %c0_69 = arith.constant 0 : index
    %c0_70 = arith.constant 0 : index
    %67 = vector.load %arg10[%c0_69, %c0_70] : memref<256x128xbf16, #tpu.memory_space<vmem>>, vector<256x128xbf16>
    %cst_71 = arith.constant dense<0.000000e+00> : vector<32x128xf32>
    %68 = tpu.matmul %66, %67, %cst_71 {dimension_numbers = #tpu.dot_dimension_numbers<[1], [0], [0], [1], [0, 0, 1, 1], [], []>} : vector<32x256xbf16>, vector<256x128xbf16>, vector<32x128xf32> -> vector<32x128xf32>
    %c0_72 = arith.constant 0 : index
    %c0_73 = arith.constant 0 : index
    %69 = vector.load %arg11[%c0_72, %c0_73] : memref<1x128xf32, #tpu.memory_space<vmem>>, vector<1x128xf32>
    %70 = vector.broadcast %69 : vector<1x128xf32> to vector<32x128xf32>
    %71 = arith.addf %68, %70 : vector<32x128xf32>
    %cst_74 = arith.constant 0.000000e+00 : f32
    %72 = vector.broadcast %cst_74 : f32 to vector<32x128xf32>
    %73 = arith.maximumf %71, %72 : vector<32x128xf32>
    %c0_75 = arith.constant 0 : index
    %c16_76 = arith.constant 16 : index
    %c0_77 = arith.constant 0 : index
    %74 = vector.load %arg13[%c0_75, %c16_76, %c0_77] : memref<2x32x128xf32, #tpu.memory_space<vmem>>, vector<2x16x128xf32>
    %75 = vector.shape_cast %74 : vector<2x16x128xf32> to vector<32x128xf32>
    %76 = arith.addf %73, %75 : vector<32x128xf32>
    %cst_78 = arith.constant 0.000000e+00 : f32
    %77 = vector.broadcast %cst_78 : f32 to vector<32x128xf32>
    %78 = arith.maximumf %76, %77 : vector<32x128xf32>
    %79 = vector.shape_cast %78 : vector<32x128xf32> to vector<2x16x128xf32>
    %c0_79 = arith.constant 0 : index
    %c0_80 = arith.constant 0 : index
    %c0_81 = arith.constant 0 : index
    %80 = vector.load %arg12[%c0_79, %c0_80, %c0_81] : memref<2x16x128xf32, #tpu.memory_space<vmem>>, vector<2x16x128xf32>
    tpu.vector_store %arg12[%c0_79, %c0_80, %c0_81], %79 {strides = array<i32>} : memref<2x16x128xf32, #tpu.memory_space<vmem>>, vector<2x16x128xf32>,
    return
  }
  func.func @transform_0(%arg0: i32) -> (i32, i32, i32) {
    %c0_i32 = arith.constant 0 : i32
    %c0_i32_0 = arith.constant 0 : i32
    %c0_i32_1 = arith.constant 0 : i32
    return %arg0, %c0_i32, %c0_i32_0 : i32, i32, i32
  }
  func.func @transform_1(%arg0: i32) -> (i32, i32) {
    %c0_i32 = arith.constant 0 : i32
    %c0_i32_0 = arith.constant 0 : i32
    %c0_i32_1 = arith.constant 0 : i32
    return %c0_i32, %c0_i32_0 : i32, i32
  }
  func.func @transform_2(%arg0: i32) -> (i32, i32) {
    %c0_i32 = arith.constant 0 : i32
    %c0_i32_0 = arith.constant 0 : i32
    %c0_i32_1 = arith.constant 0 : i32
    return %c0_i32, %c0_i32_0 : i32, i32
  }
  func.func @transform_3(%arg0: i32) -> (i32, i32) {
    %c0_i32 = arith.constant 0 : i32
    %c0_i32_0 = arith.constant 0 : i32
    %c0_i32_1 = arith.constant 0 : i32
    return %c0_i32, %c0_i32_0 : i32, i32
  }
  func.func @transform_4(%arg0: i32) -> (i32, i32) {
    %c0_i32 = arith.constant 0 : i32
    %c0_i32_0 = arith.constant 0 : i32
    %c0_i32_1 = arith.constant 0 : i32
    return %c0_i32, %c0_i32_0 : i32, i32
  }
  func.func @transform_5(%arg0: i32) -> (i32, i32) {
    %c0_i32 = arith.constant 0 : i32
    %c0_i32_0 = arith.constant 0 : i32
    %c0_i32_1 = arith.constant 0 : i32
    return %c0_i32, %c0_i32_0 : i32, i32
  }
  func.func @transform_6(%arg0: i32) -> (i32, i32) {
    %c0_i32 = arith.constant 0 : i32
    %c0_i32_0 = arith.constant 0 : i32
    %c0_i32_1 = arith.constant 0 : i32
    return %c0_i32, %c0_i32_0 : i32, i32
  }
  func.func @transform_7(%arg0: i32) -> (i32, i32) {
    %c0_i32 = arith.constant 0 : i32
    %c0_i32_0 = arith.constant 0 : i32
    %c0_i32_1 = arith.constant 0 : i32
    return %c0_i32, %c0_i32_0 : i32, i32
  }
  func.func @transform_8(%arg0: i32) -> (i32, i32) {
    %c0_i32 = arith.constant 0 : i32
    %c0_i32_0 = arith.constant 0 : i32
    %c0_i32_1 = arith.constant 0 : i32
    return %c0_i32, %c0_i32_0 : i32, i32
  }
  func.func @transform_9(%arg0: i32) -> (i32, i32) {
    %c0_i32 = arith.constant 0 : i32
    %c0_i32_0 = arith.constant 0 : i32
    %c0_i32_1 = arith.constant 0 : i32
    return %c0_i32, %c0_i32_0 : i32, i32
  }
  func.func @transform_10(%arg0: i32) -> (i32, i32) {
    %c0_i32 = arith.constant 0 : i32
    %c0_i32_0 = arith.constant 0 : i32
    %c0_i32_1 = arith.constant 0 : i32
    return %c0_i32, %c0_i32_0 : i32, i32
  }
  func.func @transform_11(%arg0: i32) -> (i32, i32, i32) {
    %c0_i32 = arith.constant 0 : i32
    %c0_i32_0 = arith.constant 0 : i32
    %c0_i32_1 = arith.constant 0 : i32
    return %arg0, %c0_i32, %c0_i32_0 : i32, i32, i32
  }
}

</mosaic_0001>

<llo_original>
// kernel: tpu_custom_call.1
$region0: #{tpu_custom_call.1}
  #allocation0 [shape = 'u32[]', space=smem, size = 0x4, offset = 0x4, fixed_abs, tag = 'smem constant byte address 0x4 - core index']
  #allocation1 [shape = 'u32[72,128]{1,0:T(1,128)}', space=vmem, size = 0x9000, scoped, tag = 'internal scratch']
  #allocation2 [shape = 'f32[2,32,128]{2,1,0:T(8,128)}', space=vmem, size = 0x8000, scoped, tag = 'scratch operand']
  #allocation3 [shape = 'bf16[2,32,128]{2,1,0:T(8,128)(2,1)}', space=vmem, size = 0x4000, scoped, tag = 'scratch operand']
  %s0 = inlined_call_operand.hbm [shape: bf16[2,16,128], index: 0, kind: input, shape index: {}]
  %s1 = inlined_call_operand.hbm [shape: bf16[256,128], index: 1, kind: input, shape index: {}]
  %s2 = inlined_call_operand.vmem [shape: f32[1,128], index: 2, kind: input, shape index: {}]
  %s3 = inlined_call_operand.hbm [shape: bf16[256,128], index: 3, kind: input, shape index: {}]
  %s4 = inlined_call_operand.vmem [shape: f32[1,128], index: 4, kind: input, shape index: {}]
  %s5 = inlined_call_operand.hbm [shape: bf16[128,128], index: 5, kind: input, shape index: {}]
  %s6 = inlined_call_operand.vmem [shape: f32[1,128], index: 6, kind: input, shape index: {}]
  %s7 = inlined_call_operand.hbm [shape: bf16[256,128], index: 7, kind: input, shape index: {}]
  %s8 = inlined_call_operand.vmem [shape: f32[1,128], index: 8, kind: input, shape index: {}]
  %s9 = inlined_call_operand.hbm [shape: bf16[256,128], index: 9, kind: input, shape index: {}]
  %s10 = inlined_call_operand.vmem [shape: f32[1,128], index: 10, kind: input, shape index: {}]
  %s11 = inlined_call_operand.hbm [shape: f32[2,16,128], index: 11, kind: output, shape index: {}]
  %s12 = sld [smem:[#allocation0]]
  $region78: #{tpu_custom_call.1} parent=0
    _
  %s14 = ssub.s32 1, %s12
  %s15 = scalar_select 0, %s14, %s12
  $region1: #{tpu_custom_call.1} parent=0
    #allocation4 [shape = 'u8[8192]{0}', space=vmem, size = 0x2000, scoped, tag = 'input window, operand 0, single buffered']
    #allocation5 [shape = 's32[1]{0}', space=sflag, size = 0x4, scoped, tag = 'scoped memory for tpu_custom_call.1']
    #allocation6 [shape = 's32[1]{0}', space=sflag, size = 0x4, scoped, tag = 'scoped memory for tpu_custom_call.1']
    #allocation7 [shape = 'u8[65536]{0}', space=vmem, size = 0x10000, scoped, tag = 'input window, operand 1, single buffered']
    #allocation8 [shape = 's32[1]{0}', space=sflag, size = 0x4, scoped, tag = 'scoped memory for tpu_custom_call.1']
    #allocation9 [shape = 'u8[65536]{0}', space=vmem, size = 0x10000, scoped, tag = 'input window, operand 3, single buffered']
    #allocation10 [shape = 'u8[32768]{0}', space=vmem, size = 0x8000, scoped, tag = 'input window, operand 5, single buffered']
    #allocation11 [shape = 's32[1]{0}', space=sflag, size = 0x4, scoped, tag = 'scoped memory for tpu_custom_call.1']
    #allocation12 [shape = 'u8[65536]{0}', space=vmem, size = 0x10000, scoped, tag = 'input window, operand 7, single buffered']
    #allocation13 [shape = 'u8[65536]{0}', space=vmem, size = 0x10000, scoped, tag = 'input window, operand 9, single buffered']
    #allocation14 [shape = 's32[1]{0}', space=sflag, size = 0x4, scoped, tag = 'scoped memory for tpu_custom_call.1']
    #allocation15 [shape = 'u8[16384]{0}', space=vmem, size = 0x4000, scoped, tag = 'output window, operand 0, single buffered']
    %16 = vsyncpa [#allocation5], 0
    %17 = vsyncpa [#allocation8], 0
    %18 = vsyncpa [#allocation11], 0
    %19 = vsyncpa [#allocation14], 0
    %20 = vsyncpa [#allocation6], 0
    // Predicated region
    $region2: #{tpu_custom_call.1} parent=1 // pred_check
      _
    $region3: #{tpu_custom_call.1} parent=1 // pred_check_branch
      %22 = sbr.rel (0) target = $region5
    $region4: #{tpu_custom_call.1} parent=1 // pred_region
      %24 = vsyncadd [#allocation5], 0
      %s25 = sshll.u32 %s0, 4
      %s26 = int_to_ptr.hbm [resolvable:$true] %s25
      %s27 = sshll.u32 [#allocation4], 4
      %s28 = int_to_ptr.vmem [resolvable:$true] %s27
      %33 = dma.hbm_to_vmem [thread:$0]  %s26, 256, %s28, [#allocation5], 64, 64, 4
    $region5: #{tpu_custom_call.1} parent=1 // pred_fallthru
      _
    // Predicated region
    $region6: #{tpu_custom_call.1} parent=1 // pred_check
      _
    $region7: #{tpu_custom_call.1} parent=1 // pred_check_branch
      %35 = sbr.rel (0) target = $region9
    $region8: #{tpu_custom_call.1} parent=1 // pred_region
      %37 = vsyncadd [#allocation8], 0
      %s38 = sshll.u32 %s1, 4
      %s39 = int_to_ptr.hbm [resolvable:$true] %s38
      %s40 = sshll.u32 [#allocation7], 4
      %s41 = int_to_ptr.vmem [resolvable:$true] %s40
      %46 = dma.hbm_to_vmem [thread:$0]  %s39, 2048, %s41, [#allocation8], 64, 64, 4
    $region9: #{tpu_custom_call.1} parent=1 // pred_fallthru
      _
    // Predicated region
    $region10: #{tpu_custom_call.1} parent=1 // pred_check
      _
    $region11: #{tpu_custom_call.1} parent=1 // pred_check_branch
      %48 = sbr.rel (0) target = $region13
    $region12: #{tpu_custom_call.1} parent=1 // pred_region
      _
    $region13: #{tpu_custom_call.1} parent=1 // pred_fallthru
      _
    // Predicated region
    $region14: #{tpu_custom_call.1} parent=1 // pred_check
      _
    $region15: #{tpu_custom_call.1} parent=1 // pred_check_branch
      %50 = sbr.rel (0) target = $region17
    $region16: #{tpu_custom_call.1} parent=1 // pred_region
      %52 = vsyncadd [#allocation8], 0
      %s53 = sshll.u32 %s3, 4
      %s54 = int_to_ptr.hbm [resolvable:$true] %s53
      %s55 = sshll.u32 [#allocation9], 4
      %s56 = int_to_ptr.vmem [resolvable:$true] %s55
      %61 = dma.hbm_to_vmem [thread:$0]  %s54, 2048, %s56, [#allocation8], 64, 64, 4
    $region17: #{tpu_custom_call.1} parent=1 // pred_fallthru
      _
    // Predicated region
    $region18: #{tpu_custom_call.1} parent=1 // pred_check
      _
    $region19: #{tpu_custom_call.1} parent=1 // pred_check_branch
      %63 = sbr.rel (0) target = $region21
    $region20: #{tpu_custom_call.1} parent=1 // pred_region
      _
    $region21: #{tpu_custom_call.1} parent=1 // pred_fallthru
      _
    // Predicated region
    $region22: #{tpu_custom_call.1} parent=1 // pred_check
      _
    $region23: #{tpu_custom_call.1} parent=1 // pred_check_branch
      %65 = sbr.rel (0) target = $region25
    $region24: #{tpu_custom_call.1} parent=1 // pred_region
      %67 = vsyncadd [#allocation11], 0
      %s68 = sshll.u32 %s5, 4
      %s69 = int_to_ptr.hbm [resolvable:$true] %s68
      %s70 = sshll.u32 [#allocation10], 4
      %s71 = int_to_ptr.vmem [resolvable:$true] %s70
      %76 = dma.hbm_to_vmem [thread:$0]  %s69, 1024, %s71, [#allocation11], 64, 64, 4
    $region25: #{tpu_custom_call.1} parent=1 // pred_fallthru
      _
    // Predicated region
    $region26: #{tpu_custom_call.1} parent=1 // pred_check
      _
    $region27: #{tpu_custom_call.1} parent=1 // pred_check_branch
      %78 = sbr.rel (0) target = $region29
    $region28: #{tpu_custom_call.1} parent=1 // pred_region
      _
    $region29: #{tpu_custom_call.1} parent=1 // pred_fallthru
      _
    // Predicated region
    $region30: #{tpu_custom_call.1} parent=1 // pred_check
      _
    $region31: #{tpu_custom_call.1} parent=1 // pred_check_branch
      %80 = sbr.rel (0) target = $region33
    $region32: #{tpu_custom_call.1} parent=1 // pred_region
      %82 = vsyncadd [#allocation11], 0
      %s83 = sshll.u32 %s7, 4
      %s84 = int_to_ptr.hbm [resolvable:$true] %s83
      %s85 = sshll.u32 [#allocation12], 4
      %s86 = int_to_ptr.vmem [resolvable:$true] %s85
      %91 = dma.hbm_to_vmem [thread:$0]  %s84, 2048, %s86, [#allocation11], 64, 64, 4
    $region33: #{tpu_custom_call.1} parent=1 // pred_fallthru
      _
    // Predicated region
    $region34: #{tpu_custom_call.1} parent=1 // pred_check
      _
    $region35: #{tpu_custom_call.1} parent=1 // pred_check_branch
      %93 = sbr.rel (0) target = $region37
    $region36: #{tpu_custom_call.1} parent=1 // pred_region
      _
    $region37: #{tpu_custom_call.1} parent=1 // pred_fallthru
      _
    // Predicated region
    $region38: #{tpu_custom_call.1} parent=1 // pred_check
      _
    $region39: #{tpu_custom_call.1} parent=1 // pred_check_branch
      %95 = sbr.rel (0) target = $region41
    $region40: #{tpu_custom_call.1} parent=1 // pred_region
      %97 = vsyncadd [#allocation14], 0
      %s98 = sshll.u32 %s9, 4
      %s99 = int_to_ptr.hbm [resolvable:$true] %s98
      %s100 = sshll.u32 [#allocation13], 4
      %s101 = int_to_ptr.vmem [resolvable:$true] %s100
      %106 = dma.hbm_to_vmem [thread:$0]  %s99, 2048, %s101, [#allocation14], 64, 64, 4
    $region41: #{tpu_custom_call.1} parent=1 // pred_fallthru
      _
    // Predicated region
    $region42: #{tpu_custom_call.1} parent=1 // pred_check
      _
    $region43: #{tpu_custom_call.1} parent=1 // pred_check_branch
      %108 = sbr.rel (0) target = $region45
    $region44: #{tpu_custom_call.1} parent=1 // pred_region
      _
    $region45: #{tpu_custom_call.1} parent=1 // pred_fallthru
      _
    // Predicated region
    $region46: #{tpu_custom_call.1} parent=1 // pred_check
      _
    $region47: #{tpu_custom_call.1} parent=1 // pred_check_branch
      %110 = sbr.rel (0) target = $region49
    $region48: #{tpu_custom_call.1} parent=1 // pred_region
      %112 = dma.done [#allocation5], 256
    $region49: #{tpu_custom_call.1} parent=1 // pred_fallthru
      _
    // Predicated region
    $region50: #{tpu_custom_call.1} parent=1 // pred_check
      _
    $region51: #{tpu_custom_call.1} parent=1 // pred_check_branch
      %114 = sbr.rel (0) target = $region53
    $region52: #{tpu_custom_call.1} parent=1 // pred_region
      %116 = dma.done [#allocation8], 2048
    $region53: #{tpu_custom_call.1} parent=1 // pred_fallthru
      _
    // Predicated region
    $region54: #{tpu_custom_call.1} parent=1 // pred_check
      _
    $region55: #{tpu_custom_call.1} parent=1 // pred_check_branch
      %118 = sbr.rel (0) target = $region57
    $region56: #{tpu_custom_call.1} parent=1 // pred_region
      %120 = dma.done [#allocation8], 2048
    $region57: #{tpu_custom_call.1} parent=1 // pred_fallthru
      _
    // Predicated region
    $region58: #{tpu_custom_call.1} parent=1 // pred_check
      _
    $region59: #{tpu_custom_call.1} parent=1 // pred_check_branch
      %122 = sbr.rel (0) target = $region61
    $region60: #{tpu_custom_call.1} parent=1 // pred_region
      %124 = dma.done [#allocation11], 1024
    $region61: #{tpu_custom_call.1} parent=1 // pred_fallthru
      _
    // Predicated region
    $region62: #{tpu_custom_call.1} parent=1 // pred_check
      _
    $region63: #{tpu_custom_call.1} parent=1 // pred_check_branch
      %126 = sbr.rel (0) target = $region65
    $region64: #{tpu_custom_call.1} parent=1 // pred_region
      %128 = dma.done [#allocation11], 2048
    $region65: #{tpu_custom_call.1} parent=1 // pred_fallthru
      _
    // Predicated region
    $region66: #{tpu_custom_call.1} parent=1 // pred_check
      _
    $region67: #{tpu_custom_call.1} parent=1 // pred_check_branch
      %130 = sbr.rel (0) target = $region69
    $region68: #{tpu_custom_call.1} parent=1 // pred_region
      %132 = dma.done [#allocation14], 2048
    $region69: #{tpu_custom_call.1} parent=1 // pred_fallthru
      _
    %134 = vst [vmem:[#allocation2] sm:$0xff] 0.0
    %135 = vst [vmem:[#allocation2 + $0x8] sm:$0xff] 0.0
    %136 = vst [vmem:[#allocation2 + $0x20] sm:$0xff] 0.0
    %137 = vst [vmem:[#allocation2 + $0x28] sm:$0xff] 0.0
    %138 = vst [vmem:[#allocation3] sm:$0xf] 0
    %139 = vst [vmem:[#allocation3 + $0x4] sm:$0xf] 0
    %140 = vst [vmem:[#allocation3 + $0x10] sm:$0xf] 0
    %141 = vst [vmem:[#allocation3 + $0x14] sm:$0xf] 0
    %v142 = vld [vmem:[#allocation4] sm:$0xf]
    %v143 = vld [vmem:[#allocation4 + $0x4] sm:$0xf]
    %v144 = vld [vmem:[#allocation4 + $0x8] sm:$0xf]
    %v145 = vld [vmem:[#allocation4 + $0xc] sm:$0xf]
    %v146 = vunpack.c.l.bf16 %v142
    %v147 = vunpack.c.l.bf16 %v143
    %v148 = vunpack.c.l.bf16 %v144
    %v149 = vunpack.c.l.bf16 %v145
    %150 = vst [vmem:[#allocation2 + $0x10] sm:$0xff] %v146
    %151 = vst [vmem:[#allocation2 + $0x18] sm:$0xff] %v147
    %152 = vst [vmem:[#allocation2 + $0x30] sm:$0xff] %v148
    %153 = vst [vmem:[#allocation2 + $0x38] sm:$0xff] %v149
    %v154 = vld [vmem:[#allocation2 + $0xf] sm:$0xff]
    %v155 = vld [vmem:[#allocation2 + $0x17] sm:$0xff]
    %v156 = vld [vmem:[#allocation2 + $0x2f] sm:$0xff]
    %v157 = vld [vmem:[#allocation2 + $0x37] sm:$0xff]
    %v158 = vpack.c.bf16 %v154, %v154
    %v159 = vpack.c.bf16 %v155, %v155
    %v160 = vpack.c.bf16 %v156, %v156
    %v161 = vpack.c.bf16 %v157, %v157
    %v162 = vld [vmem:[#allocation2 + $0x10] sm:$0xff]
    %v163 = vld [vmem:[#allocation2 + $0x18] sm:$0xff]
    %v164 = vld [vmem:[#allocation2 + $0x30] sm:$0xff]
    %v165 = vld [vmem:[#allocation2 + $0x38] sm:$0xff]
    %v166 = vpack.c.bf16 %v162, %v162
    %v167 = vpack.c.bf16 %v163, %v163
    %v168 = vpack.c.bf16 %v164, %v164
    %v169 = vpack.c.bf16 %v165, %v165
    %v174 = vunpack.c.l.b16 %v158
    %v175 = vunpack.c.l.b16 %v159
    %v176 = vunpack.c.l.b16 %v160
    %v177 = vunpack.c.l.b16 %v161
    %v178 = vpack.c.b16 %v175, %v174
    %v179 = vpack.c.b16 %v177, %v176
    %v186 = vunpack.c.l.b16 %v166
    %v187 = vunpack.c.l.b16 %v167
    %v188 = vunpack.c.l.b16 %v168
    %v189 = vunpack.c.l.b16 %v169
    %v190 = vpack.c.b16 %v187, %v186
    %v191 = vpack.c.b16 %v189, %v188
    %v194 = vld [vmem:[#allocation7] sm:$0xf]
    %v195 = vld [vmem:[#allocation7 + $0x4] sm:$0xf]
    %v196 = vld [vmem:[#allocation7 + $0x8] sm:$0xf]
    %v197 = vld [vmem:[#allocation7 + $0xc] sm:$0xf]
    %v198 = vld [vmem:[#allocation7 + $0x10] sm:$0xf]
    %v199 = vld [vmem:[#allocation7 + $0x14] sm:$0xf]
    %v200 = vld [vmem:[#allocation7 + $0x18] sm:$0xf]
    %v201 = vld [vmem:[#allocation7 + $0x1c] sm:$0xf]
    %v202 = vld [vmem:[#allocation7 + $0x20] sm:$0xf]
    %v203 = vld [vmem:[#allocation7 + $0x24] sm:$0xf]
    %v204 = vld [vmem:[#allocation7 + $0x28] sm:$0xf]
    %v205 = vld [vmem:[#allocation7 + $0x2c] sm:$0xf]
    %v206 = vld [vmem:[#allocation7 + $0x30] sm:$0xf]
    %v207 = vld [vmem:[#allocation7 + $0x34] sm:$0xf]
    %v208 = vld [vmem:[#allocation7 + $0x38] sm:$0xf]
    %v209 = vld [vmem:[#allocation7 + $0x3c] sm:$0xf]
    %v210 = vld [vmem:[#allocation7 + $0x40] sm:$0xf]
    %v211 = vld [vmem:[#allocation7 + $0x44] sm:$0xf]
    %v212 = vld [vmem:[#allocation7 + $0x48] sm:$0xf]
    %v213 = vld [vmem:[#allocation7 + $0x4c] sm:$0xf]
    %v214 = vld [vmem:[#allocation7 + $0x50] sm:$0xf]
    %v215 = vld [vmem:[#allocation7 + $0x54] sm:$0xf]
    %v216 = vld [vmem:[#allocation7 + $0x58] sm:$0xf]
    %v217 = vld [vmem:[#allocation7 + $0x5c] sm:$0xf]
    %v218 = vld [vmem:[#allocation7 + $0x60] sm:$0xf]
    %v219 = vld [vmem:[#allocation7 + $0x64] sm:$0xf]
    %v220 = vld [vmem:[#allocation7 + $0x68] sm:$0xf]
    %v221 = vld [vmem:[#allocation7 + $0x6c] sm:$0xf]
    %v222 = vld [vmem:[#allocation7 + $0x70] sm:$0xf]
    %v223 = vld [vmem:[#allocation7 + $0x74] sm:$0xf]
    %v224 = vld [vmem:[#allocation7 + $0x78] sm:$0xf]
    %v225 = vld [vmem:[#allocation7 + $0x7c] sm:$0xf]
    %v226 = vld [vmem:[%s2] sm:$0x1]
    %v228 = vperm.slane %v226, 0
    %v262 = vunpack.c.l.b16 %v194
    %v263 = vunpack.c.l.b16 %v195
    %v264 = vunpack.c.l.b16 %v196
    %v265 = vunpack.c.l.b16 %v197
    %v266 = vunpack.c.l.b16 %v198
    %v267 = vunpack.c.l.b16 %v199
    %v268 = vunpack.c.l.b16 %v200
    %v269 = vunpack.c.l.b16 %v201
    %v270 = vunpack.c.l.b16 %v202
    %v271 = vunpack.c.l.b16 %v203
    %v272 = vunpack.c.l.b16 %v204
    %v273 = vunpack.c.l.b16 %v205
    %v274 = vunpack.c.l.b16 %v206
    %v275 = vunpack.c.l.b16 %v207
    %v276 = vunpack.c.l.b16 %v208
    %v277 = vunpack.c.l.b16 %v209
    %v278 = vunpack.c.l.b16 %v210
    %v279 = vunpack.c.l.b16 %v211
    %v280 = vunpack.c.l.b16 %v212
    %v281 = vunpack.c.l.b16 %v213
    %v282 = vunpack.c.l.b16 %v214
    %v283 = vunpack.c.l.b16 %v215
    %v284 = vunpack.c.l.b16 %v216
    %v285 = vunpack.c.l.b16 %v217
    %v286 = vunpack.c.l.b16 %v218
    %v287 = vunpack.c.l.b16 %v219
    %v288 = vunpack.c.l.b16 %v220
    %v289 = vunpack.c.l.b16 %v221
    %v290 = vunpack.c.l.b16 %v222
    %v291 = vunpack.c.l.b16 %v223
    %v292 = vunpack.c.l.b16 %v224
    %v293 = vunpack.c.l.b16 %v225
    %v294 = vpack.c.b16 %v263, %v262
    %v295 = vpack.c.b16 %v265, %v264
    %v296 = vpack.c.b16 %v267, %v266
    %v297 = vpack.c.b16 %v269, %v268
    %v298 = vpack.c.b16 %v271, %v270
    %v299 = vpack.c.b16 %v273, %v272
    %v300 = vpack.c.b16 %v275, %v274
    %v301 = vpack.c.b16 %v277, %v276
    %v302 = vpack.c.b16 %v279, %v278
    %v303 = vpack.c.b16 %v281, %v280
    %v304 = vpack.c.b16 %v283, %v282
    %v305 = vpack.c.b16 %v285, %v284
    %v306 = vpack.c.b16 %v287, %v286
    %v307 = vpack.c.b16 %v289, %v288
    %v308 = vpack.c.b16 %v291, %v290
    %v309 = vpack.c.b16 %v293, %v292
    %326 = vmatpush.bf16.msra.mxu0 %v301
    %327 = vmatpush.bf16.msra.mxu0 %v300
    %328 = vmatpush.bf16.msra.mxu0 %v299
    %329 = vmatpush.bf16.msra.mxu0 %v298
    %330 = vmatpush.bf16.msra.mxu0 %v297
    %331 = vmatpush.bf16.msra.mxu0 %v296
    %332 = vmatpush.bf16.msra.mxu0 %v295
    %333 = vmatpush.bf16.msra.mxu0 %v294
    %334 = vmatmul.bf16.gmra.mxu0 %v178
    %v335 = vpop.f32.mrf.mxu0
    %v336 = vadd.f32 %v228, %v335
    %v337 = vpop.f32.mrf.mxu0
    %v338 = vadd.f32 %v228, %v337
    %339 = vmatmul.bf16.gmra.mxu0 %v179
    %v340 = vpop.f32.mrf.mxu0
    %v341 = vadd.f32 %v228, %v340
    %v342 = vpop.f32.mrf.mxu0
    %v343 = vadd.f32 %v228, %v342
    %344 = vdwg.mxu0
    %345 = vmatpush.bf16.msra.mxu0 %v309
    %346 = vmatpush.bf16.msra.mxu0 %v308
    %347 = vmatpush.bf16.msra.mxu0 %v307
    %348 = vmatpush.bf16.msra.mxu0 %v306
    %349 = vmatpush.bf16.msra.mxu0 %v305
    %350 = vmatpush.bf16.msra.mxu0 %v304
    %351 = vmatpush.bf16.msra.mxu0 %v303
    %352 = vmatpush.bf16.msra.mxu0 %v302
    %353 = vmatmul.bf16.gmra.mxu0 %v190
    %v354 = vpop.f32.mrf.mxu0
    %v355 = vadd.f32 %v336, %v354
    %v356 = vpop.f32.mrf.mxu0
    %v357 = vadd.f32 %v338, %v356
    %358 = vmatmul.bf16.gmra.mxu0 %v191
    %v359 = vpop.f32.mrf.mxu0
    %v360 = vadd.f32 %v341, %v359
    %v361 = vpop.f32.mrf.mxu0
    %v362 = vadd.f32 %v343, %v361
    %363 = vdwg.mxu0
    %v364 = vmax.f32 %v355, 0.0
    %v365 = vmax.f32 %v357, 0.0
    %v366 = vmax.f32 %v360, 0.0
    %v367 = vmax.f32 %v362, 0.0
    %v368 = vpack.c.bf16 %v364, %v364
    %v369 = vpack.c.bf16 %v365, %v365
    %v370 = vpack.c.bf16 %v366, %v366
    %v371 = vpack.c.bf16 %v367, %v367
    %372 = vst [vmem:[#allocation3 + $0x8] sm:$0xf] %v368
    %373 = vst [vmem:[#allocation3 + $0xc] sm:$0xf] %v369
    %374 = vst [vmem:[#allocation3 + $0x18] sm:$0xf] %v370
    %375 = vst [vmem:[#allocation3 + $0x1c] sm:$0xf] %v371
    %v376 = vld [vmem:[#allocation3 + $0x4] sm:$0x8]
    %v377 = vld [vmem:[#allocation3 + $0x8] sm:$0xf]
    %v378 = vld [vmem:[#allocation3 + $0xc] sm:$0xf]
    %v379 = vld [vmem:[#allocation3 + $0x14] sm:$0x8]
    %v380 = vld [vmem:[#allocation3 + $0x18] sm:$0xf]
    %v381 = vld [vmem:[#allocation3 + $0x1c] sm:$0xf]
    %v388 = vunpack.c.l.b16 %v376
    %v389 = vunpack.c.l.b16 %v377
    %v390 = vunpack.c.l.b16 %v378
    %v391 = vunpack.c.l.b16 %v379
    %v392 = vunpack.c.l.b16 %v380
    %v393 = vunpack.c.l.b16 %v381
    %v394 = vpack.c.b16 %v389, %v388
    %v395 = vpack.c.b16 %v390, %v390
    %v396 = vpack.c.b16 %v392, %v391
    %v397 = vpack.c.b16 %v393, %v393
    %v398 = vpack.c.b16 %v390, %v389
    %v399 = vpack.c.b16 %v393, %v392
    %v401 = vshrl.u32 %v398, 16
    %v403 = vrot.slane %v401, 4
    %v404 = vshll.u32 %v398, 16
    %v406 = vrot.slane %v404, 5
    %v407 = vor.u32 %v403, %v406
    %v409 = vshrl.u32 %v399, 16
    %v411 = vrot.slane %v409, 4
    %v412 = vshll.u32 %v399, 16
    %v414 = vrot.slane %v412, 5
    %v415 = vor.u32 %v411, %v414
    %vm416 = vsmask.f32 4352
    %v418 = vshrl.u32 %v394, 16
    %v420 = vrot.slane %v418, 3
    %v421 = vshll.u32 %v394, 16
    %v423 = vrot.slane %v421, 4
    %v424 = vor.u32 %v420, %v423
    %v426 = vshrl.u32 %v395, 16
    %v428 = vrot.slane %v426, 3
    %v429 = vshll.u32 %v395, 16
    %v431 = vrot.slane %v429, 4
    %v432 = vor.u32 %v428, %v431
    %v433 = vsel %vm416, %v424, %v432
    %v435 = vshrl.u32 %v407, 16
    %v437 = vrot.slane %v435, 3
    %v438 = vshll.u32 %v407, 16
    %v440 = vrot.slane %v438, 4
    %v441 = vor.u32 %v437, %v440
    %v442 = vsel %vm416, %v441, %v441
    %v444 = vshrl.u32 %v396, 16
    %v446 = vrot.slane %v444, 3
    %v447 = vshll.u32 %v396, 16
    %v449 = vrot.slane %v447, 4
    %v450 = vor.u32 %v446, %v449
    %v452 = vshrl.u32 %v397, 16
    %v454 = vrot.slane %v452, 3
    %v455 = vshll.u32 %v397, 16
    %v457 = vrot.slane %v455, 4
    %v458 = vor.u32 %v454, %v457
    %v459 = vsel %vm416, %v450, %v458
    %v461 = vshrl.u32 %v415, 16
    %v463 = vrot.slane %v461, 3
    %v464 = vshll.u32 %v415, 16
    %v466 = vrot.slane %v464, 4
    %v467 = vor.u32 %v463, %v466
    %v468 = vsel %vm416, %v467, %v467
    %v473 = vld [vmem:[#allocation9] sm:$0xf]
    %v474 = vld [vmem:[#allocation9 + $0x4] sm:$0xf]
    %v475 = vld [vmem:[#allocation9 + $0x8] sm:$0xf]
    %v476 = vld [vmem:[#allocation9 + $0xc] sm:$0xf]
    %v477 = vld [vmem:[#allocation9 + $0x10] sm:$0xf]
    %v478 = vld [vmem:[#allocation9 + $0x14] sm:$0xf]
    %v479 = vld [vmem:[#allocation9 + $0x18] sm:$0xf]
    %v480 = vld [vmem:[#allocation9 + $0x1c] sm:$0xf]
    %v481 = vld [vmem:[#allocation9 + $0x20] sm:$0xf]
    %v482 = vld [vmem:[#allocation9 + $0x24] sm:$0xf]
    %v483 = vld [vmem:[#allocation9 + $0x28] sm:$0xf]
    %v484 = vld [vmem:[#allocation9 + $0x2c] sm:$0xf]
    %v485 = vld [vmem:[#allocation9 + $0x30] sm:$0xf]
    %v486 = vld [vmem:[#allocation9 + $0x34] sm:$0xf]
    %v487 = vld [vmem:[#allocation9 + $0x38] sm:$0xf]
    %v488 = vld [vmem:[#allocation9 + $0x3c] sm:$0xf]
    %v489 = vld [vmem:[#allocation9 + $0x40] sm:$0xf]
    %v490 = vld [vmem:[#allocation9 + $0x44] sm:$0xf]
    %v491 = vld [vmem:[#allocation9 + $0x48] sm:$0xf]
    %v492 = vld [vmem:[#allocation9 + $0x4c] sm:$0xf]
    %v493 = vld [vmem:[#allocation9 + $0x50] sm:$0xf]
    %v494 = vld [vmem:[#allocation9 + $0x54] sm:$0xf]
    %v495 = vld [vmem:[#allocation9 + $0x58] sm:$0xf]
    %v496 = vld [vmem:[#allocation9 + $0x5c] sm:$0xf]
    %v497 = vld [vmem:[#allocation9 + $0x60] sm:$0xf]
    %v498 = vld [vmem:[#allocation9 + $0x64] sm:$0xf]
    %v499 = vld [vmem:[#allocation9 + $0x68] sm:$0xf]
    %v500 = vld [vmem:[#allocation9 + $0x6c] sm:$0xf]
    %v501 = vld [vmem:[#allocation9 + $0x70] sm:$0xf]
    %v502 = vld [vmem:[#allocation9 + $0x74] sm:$0xf]
    %v503 = vld [vmem:[#allocation9 + $0x78] sm:$0xf]
    %v504 = vld [vmem:[#allocation9 + $0x7c] sm:$0xf]
    %v505 = vld [vmem:[%s4] sm:$0x1]
    %v507 = vperm.slane %v505, 0
    %v541 = vunpack.c.l.b16 %v473
    %v542 = vunpack.c.l.b16 %v474
    %v543 = vunpack.c.l.b16 %v475
    %v544 = vunpack.c.l.b16 %v476
    %v545 = vunpack.c.l.b16 %v477
    %v546 = vunpack.c.l.b16 %v478
    %v547 = vunpack.c.l.b16 %v479
    %v548 = vunpack.c.l.b16 %v480
    %v549 = vunpack.c.l.b16 %v481
    %v550 = vunpack.c.l.b16 %v482
    %v551 = vunpack.c.l.b16 %v483
    %v552 = vunpack.c.l.b16 %v484
    %v553 = vunpack.c.l.b16 %v485
    %v554 = vunpack.c.l.b16 %v486
    %v555 = vunpack.c.l.b16 %v487
    %v556 = vunpack.c.l.b16 %v488
    %v557 = vunpack.c.l.b16 %v489
    %v558 = vunpack.c.l.b16 %v490
    %v559 = vunpack.c.l.b16 %v491
    %v560 = vunpack.c.l.b16 %v492
    %v561 = vunpack.c.l.b16 %v493
    %v562 = vunpack.c.l.b16 %v494
    %v563 = vunpack.c.l.b16 %v495
    %v564 = vunpack.c.l.b16 %v496
    %v565 = vunpack.c.l.b16 %v497
    %v566 = vunpack.c.l.b16 %v498
    %v567 = vunpack.c.l.b16 %v499
    %v568 = vunpack.c.l.b16 %v500
    %v569 = vunpack.c.l.b16 %v501
    %v570 = vunpack.c.l.b16 %v502
    %v571 = vunpack.c.l.b16 %v503
    %v572 = vunpack.c.l.b16 %v504
    %v573 = vpack.c.b16 %v542, %v541
    %v574 = vpack.c.b16 %v544, %v543
    %v575 = vpack.c.b16 %v546, %v545
    %v576 = vpack.c.b16 %v548, %v547
    %v577 = vpack.c.b16 %v550, %v549
    %v578 = vpack.c.b16 %v552, %v551
    %v579 = vpack.c.b16 %v554, %v553
    %v580 = vpack.c.b16 %v556, %v555
    %v581 = vpack.c.b16 %v558, %v557
    %v582 = vpack.c.b16 %v560, %v559
    %v583 = vpack.c.b16 %v562, %v561
    %v584 = vpack.c.b16 %v564, %v563
    %v585 = vpack.c.b16 %v566, %v565
    %v586 = vpack.c.b16 %v568, %v567
    %v587 = vpack.c.b16 %v570, %v569
    %v588 = vpack.c.b16 %v572, %v571
    %605 = vmatpush.bf16.msra.mxu0 %v580
    %606 = vmatpush.bf16.msra.mxu0 %v579
    %607 = vmatpush.bf16.msra.mxu0 %v578
    %608 = vmatpush.bf16.msra.mxu0 %v577
    %609 = vmatpush.bf16.msra.mxu0 %v576
    %610 = vmatpush.bf16.msra.mxu0 %v575
    %611 = vmatpush.bf16.msra.mxu0 %v574
    %612 = vmatpush.bf16.msra.mxu0 %v573
    %613 = vmatmul.bf16.gmra.mxu0 %v433
    %v614 = vpop.f32.mrf.mxu0
    %v615 = vadd.f32 %v507, %v614
    %v616 = vpop.f32.mrf.mxu0
    %v617 = vadd.f32 %v507, %v616
    %618 = vmatmul.bf16.gmra.mxu0 %v459
    %v619 = vpop.f32.mrf.mxu0
    %v620 = vadd.f32 %v507, %v619
    %v621 = vpop.f32.mrf.mxu0
    %v622 = vadd.f32 %v507, %v621
    %623 = vdwg.mxu0
    %624 = vmatpush.bf16.msra.mxu0 %v588
    %625 = vmatpush.bf16.msra.mxu0 %v587
    %626 = vmatpush.bf16.msra.mxu0 %v586
    %627 = vmatpush.bf16.msra.mxu0 %v585
    %628 = vmatpush.bf16.msra.mxu0 %v584
    %629 = vmatpush.bf16.msra.mxu0 %v583
    %630 = vmatpush.bf16.msra.mxu0 %v582
    %631 = vmatpush.bf16.msra.mxu0 %v581
    %632 = vmatmul.bf16.gmra.mxu0 %v442
    %v633 = vpop.f32.mrf.mxu0
    %v634 = vadd.f32 %v615, %v633
    %v635 = vpop.f32.mrf.mxu0
    %v636 = vadd.f32 %v617, %v635
    %637 = vmatmul.bf16.gmra.mxu0 %v468
    %v638 = vpop.f32.mrf.mxu0
    %v639 = vadd.f32 %v620, %v638
    %v640 = vpop.f32.mrf.mxu0
    %v641 = vadd.f32 %v622, %v640
    %642 = vdwg.mxu0
    %v643 = vmax.f32 %v634, 0.0
    %v644 = vmax.f32 %v636, 0.0
    %v645 = vmax.f32 %v639, 0.0
    %v646 = vmax.f32 %v641, 0.0
    %v647 = vld [vmem:[#allocation2 + $0x10] sm:$0xff]
    %v648 = vld [vmem:[#allocation2 + $0x18] sm:$0xff]
    %v649 = vld [vmem:[#allocation2 + $0x30] sm:$0xff]
    %v650 = vld [vmem:[#allocation2 + $0x38] sm:$0xff]
    %v651 = vpack.c.bf16 %v648, %v647
    %v652 = vpack.c.bf16 %v650, %v649
    %v653 = vld [vmem:[#allocation10] sm:$0xf]
    %v654 = vld [vmem:[#allocation10 + $0x4] sm:$0xf]
    %v655 = vld [vmem:[#allocation10 + $0x8] sm:$0xf]
    %v656 = vld [vmem:[#allocation10 + $0xc] sm:$0xf]
    %v657 = vld [vmem:[#allocation10 + $0x10] sm:$0xf]
    %v658 = vld [vmem:[#allocation10 + $0x14] sm:$0xf]
    %v659 = vld [vmem:[#allocation10 + $0x18] sm:$0xf]
    %v660 = vld [vmem:[#allocation10 + $0x1c] sm:$0xf]
    %v661 = vld [vmem:[#allocation10 + $0x20] sm:$0xf]
    %v662 = vld [vmem:[#allocation10 + $0x24] sm:$0xf]
    %v663 = vld [vmem:[#allocation10 + $0x28] sm:$0xf]
    %v664 = vld [vmem:[#allocation10 + $0x2c] sm:$0xf]
    %v665 = vld [vmem:[#allocation10 + $0x30] sm:$0xf]
    %v666 = vld [vmem:[#allocation10 + $0x34] sm:$0xf]
    %v667 = vld [vmem:[#allocation10 + $0x38] sm:$0xf]
    %v668 = vld [vmem:[#allocation10 + $0x3c] sm:$0xf]
    %v669 = vld [vmem:[%s6] sm:$0x1]
    %v671 = vperm.slane %v669, 0
    %v689 = vunpack.c.l.b16 %v653
    %v690 = vunpack.c.l.b16 %v654
    %v691 = vunpack.c.l.b16 %v655
    %v692 = vunpack.c.l.b16 %v656
    %v693 = vunpack.c.l.b16 %v657
    %v694 = vunpack.c.l.b16 %v658
    %v695 = vunpack.c.l.b16 %v659
    %v696 = vunpack.c.l.b16 %v660
    %v697 = vunpack.c.l.b16 %v661
    %v698 = vunpack.c.l.b16 %v662
    %v699 = vunpack.c.l.b16 %v663
    %v700 = vunpack.c.l.b16 %v664
    %v701 = vunpack.c.l.b16 %v665
    %v702 = vunpack.c.l.b16 %v666
    %v703 = vunpack.c.l.b16 %v667
    %v704 = vunpack.c.l.b16 %v668
    %v705 = vpack.c.b16 %v690, %v689
    %v706 = vpack.c.b16 %v692, %v691
    %v707 = vpack.c.b16 %v694, %v693
    %v708 = vpack.c.b16 %v696, %v695
    %v709 = vpack.c.b16 %v698, %v697
    %v710 = vpack.c.b16 %v700, %v699
    %v711 = vpack.c.b16 %v702, %v701
    %v712 = vpack.c.b16 %v704, %v703
    %721 = vmatpush.bf16.msra.mxu0 %v712
    %722 = vmatpush.bf16.msra.mxu0 %v711
    %723 = vmatpush.bf16.msra.mxu0 %v710
    %724 = vmatpush.bf16.msra.mxu0 %v709
    %725 = vmatpush.bf16.msra.mxu0 %v708
    %726 = vmatpush.bf16.msra.mxu0 %v707
    %727 = vmatpush.bf16.msra.mxu0 %v706
    %728 = vmatpush.bf16.msra.mxu0 %v705
    %729 = vmatmul.bf16.gmra.mxu0 %v651
    %v730 = vpop.f32.mrf.mxu0
    %v731 = vadd.f32 %v671, %v730
    %v732 = vpop.f32.mrf.mxu0
    %v733 = vadd.f32 %v671, %v732
    %734 = vmatmul.bf16.gmra.mxu0 %v652
    %v735 = vpop.f32.mrf.mxu0
    %v736 = vadd.f32 %v671, %v735
    %v737 = vpop.f32.mrf.mxu0
    %v738 = vadd.f32 %v671, %v737
    %739 = vdwg.mxu0
    %v740 = vadd.f32 %v643, %v731
    %v741 = vadd.f32 %v644, %v733
    %v742 = vadd.f32 %v645, %v736
    %v743 = vadd.f32 %v646, %v738
    %v744 = vmax.f32 %v740, 0.0
    %v745 = vmax.f32 %v741, 0.0
    %v746 = vmax.f32 %v742, 0.0
    %v747 = vmax.f32 %v743, 0.0
    %748 = vst [vmem:[#allocation2 + $0x10] sm:$0xff] %v744
    %749 = vst [vmem:[#allocation2 + $0x18] sm:$0xff] %v745
    %750 = vst [vmem:[#allocation2 + $0x30] sm:$0xff] %v746
    %751 = vst [vmem:[#allocation2 + $0x38] sm:$0xff] %v747
    %v752 = vld [vmem:[#allocation2 + $0xe] sm:$0xff]
    %v753 = vld [vmem:[#allocation2 + $0x16] sm:$0xff]
    %v754 = vld [vmem:[#allocation2 + $0x2e] sm:$0xff]
    %v755 = vld [vmem:[#allocation2 + $0x36] sm:$0xff]
    %v756 = vpack.c.bf16 %v752, %v752
    %v757 = vpack.c.bf16 %v753, %v753
    %v758 = vpack.c.bf16 %v754, %v754
    %v759 = vpack.c.bf16 %v755, %v755
    %v760 = vld [vmem:[#allocation2 + $0x10] sm:$0xff]
    %v761 = vld [vmem:[#allocation2 + $0x18] sm:$0xff]
    %v762 = vld [vmem:[#allocation2 + $0x30] sm:$0xff]
    %v763 = vld [vmem:[#allocation2 + $0x38] sm:$0xff]
    %v764 = vpack.c.bf16 %v760, %v760
    %v765 = vpack.c.bf16 %v761, %v761
    %v766 = vpack.c.bf16 %v762, %v762
    %v767 = vpack.c.bf16 %v763, %v763
    %v772 = vunpack.c.l.b16 %v756
    %v773 = vunpack.c.l.b16 %v757
    %v774 = vunpack.c.l.b16 %v758
    %v775 = vunpack.c.l.b16 %v759
    %v776 = vpack.c.b16 %v773, %v772
    %v777 = vpack.c.b16 %v775, %v774
    %v784 = vunpack.c.l.b16 %v764
    %v785 = vunpack.c.l.b16 %v765
    %v786 = vunpack.c.l.b16 %v766
    %v787 = vunpack.c.l.b16 %v767
    %v788 = vpack.c.b16 %v785, %v784
    %v789 = vpack.c.b16 %v787, %v786
    %v792 = vld [vmem:[#allocation12] sm:$0xf]
    %v793 = vld [vmem:[#allocation12 + $0x4] sm:$0xf]
    %v794 = vld [vmem:[#allocation12 + $0x8] sm:$0xf]
    %v795 = vld [vmem:[#allocation12 + $0xc] sm:$0xf]
    %v796 = vld [vmem:[#allocation12 + $0x10] sm:$0xf]
    %v797 = vld [vmem:[#allocation12 + $0x14] sm:$0xf]
    %v798 = vld [vmem:[#allocation12 + $0x18] sm:$0xf]
    %v799 = vld [vmem:[#allocation12 + $0x1c] sm:$0xf]
    %v800 = vld [vmem:[#allocation12 + $0x20] sm:$0xf]
    %v801 = vld [vmem:[#allocation12 + $0x24] sm:$0xf]
    %v802 = vld [vmem:[#allocation12 + $0x28] sm:$0xf]
    %v803 = vld [vmem:[#allocation12 + $0x2c] sm:$0xf]
    %v804 = vld [vmem:[#allocation12 + $0x30] sm:$0xf]
    %v805 = vld [vmem:[#allocation12 + $0x34] sm:$0xf]
    %v806 = vld [vmem:[#allocation12 + $0x38] sm:$0xf]
    %v807 = vld [vmem:[#allocation12 + $0x3c] sm:$0xf]
    %v808 = vld [vmem:[#allocation12 + $0x40] sm:$0xf]
    %v809 = vld [vmem:[#allocation12 + $0x44] sm:$0xf]
    %v810 = vld [vmem:[#allocation12 + $0x48] sm:$0xf]
    %v811 = vld [vmem:[#allocation12 + $0x4c] sm:$0xf]
    %v812 = vld [vmem:[#allocation12 + $0x50] sm:$0xf]
    %v813 = vld [vmem:[#allocation12 + $0x54] sm:$0xf]
    %v814 = vld [vmem:[#allocation12 + $0x58] sm:$0xf]
    %v815 = vld [vmem:[#allocation12 + $0x5c] sm:$0xf]
    %v816 = vld [vmem:[#allocation12 + $0x60] sm:$0xf]
    %v817 = vld [vmem:[#allocation12 + $0x64] sm:$0xf]
    %v818 = vld [vmem:[#allocation12 + $0x68] sm:$0xf]
    %v819 = vld [vmem:[#allocation12 + $0x6c] sm:$0xf]
    %v820 = vld [vmem:[#allocation12 + $0x70] sm:$0xf]
    %v821 = vld [vmem:[#allocation12 + $0x74] sm:$0xf]
    %v822 = vld [vmem:[#allocation12 + $0x78] sm:$0xf]
    %v823 = vld [vmem:[#allocation12 + $0x7c] sm:$0xf]
    %v824 = vld [vmem:[%s8] sm:$0x1]
    %v826 = vperm.slane %v824, 0
    %v860 = vunpack.c.l.b16 %v792
    %v861 = vunpack.c.l.b16 %v793
    %v862 = vunpack.c.l.b16 %v794
    %v863 = vunpack.c.l.b16 %v795
    %v864 = vunpack.c.l.b16 %v796
    %v865 = vunpack.c.l.b16 %v797
    %v866 = vunpack.c.l.b16 %v798
    %v867 = vunpack.c.l.b16 %v799
    %v868 = vunpack.c.l.b16 %v800
    %v869 = vunpack.c.l.b16 %v801
    %v870 = vunpack.c.l.b16 %v802
    %v871 = vunpack.c.l.b16 %v803
    %v872 = vunpack.c.l.b16 %v804
    %v873 = vunpack.c.l.b16 %v805
    %v874 = vunpack.c.l.b16 %v806
    %v875 = vunpack.c.l.b16 %v807
    %v876 = vunpack.c.l.b16 %v808
    %v877 = vunpack.c.l.b16 %v809
    %v878 = vunpack.c.l.b16 %v810
    %v879 = vunpack.c.l.b16 %v811
    %v880 = vunpack.c.l.b16 %v812
    %v881 = vunpack.c.l.b16 %v813
    %v882 = vunpack.c.l.b16 %v814
    %v883 = vunpack.c.l.b16 %v815
    %v884 = vunpack.c.l.b16 %v816
    %v885 = vunpack.c.l.b16 %v817
    %v886 = vunpack.c.l.b16 %v818
    %v887 = vunpack.c.l.b16 %v819
    %v888 = vunpack.c.l.b16 %v820
    %v889 = vunpack.c.l.b16 %v821
    %v890 = vunpack.c.l.b16 %v822
    %v891 = vunpack.c.l.b16 %v823
    %v892 = vpack.c.b16 %v861, %v860
    %v893 = vpack.c.b16 %v863, %v862
    %v894 = vpack.c.b16 %v865, %v864
    %v895 = vpack.c.b16 %v867, %v866
    %v896 = vpack.c.b16 %v869, %v868
    %v897 = vpack.c.b16 %v871, %v870
    %v898 = vpack.c.b16 %v873, %v872
    %v899 = vpack.c.b16 %v875, %v874
    %v900 = vpack.c.b16 %v877, %v876
    %v901 = vpack.c.b16 %v879, %v878
    %v902 = vpack.c.b16 %v881, %v880
    %v903 = vpack.c.b16 %v883, %v882
    %v904 = vpack.c.b16 %v885, %v884
    %v905 = vpack.c.b16 %v887, %v886
    %v906 = vpack.c.b16 %v889, %v888
    %v907 = vpack.c.b16 %v891, %v890
    %924 = vmatpush.bf16.msra.mxu0 %v899
    %925 = vmatpush.bf16.msra.mxu0 %v898
    %926 = vmatpush.bf16.msra.mxu0 %v897
    %927 = vmatpush.bf16.msra.mxu0 %v896
    %928 = vmatpush.bf16.msra.mxu0 %v895
    %929 = vmatpush.bf16.msra.mxu0 %v894
    %930 = vmatpush.bf16.msra.mxu0 %v893
    %931 = vmatpush.bf16.msra.mxu0 %v892
    %932 = vmatmul.bf16.gmra.mxu0 %v776
    %v933 = vpop.f32.mrf.mxu0
    %v934 = vadd.f32 %v826, %v933
    %v935 = vpop.f32.mrf.mxu0
    %v936 = vadd.f32 %v826, %v935
    %937 = vmatmul.bf16.gmra.mxu0 %v777
    %v938 = vpop.f32.mrf.mxu0
    %v939 = vadd.f32 %v826, %v938
    %v940 = vpop.f32.mrf.mxu0
    %v941 = vadd.f32 %v826, %v940
    %942 = vdwg.mxu0
    %943 = vmatpush.bf16.msra.mxu0 %v907
    %944 = vmatpush.bf16.msra.mxu0 %v906
    %945 = vmatpush.bf16.msra.mxu0 %v905
    %946 = vmatpush.bf16.msra.mxu0 %v904
    %947 = vmatpush.bf16.msra.mxu0 %v903
    %948 = vmatpush.bf16.msra.mxu0 %v902
    %949 = vmatpush.bf16.msra.mxu0 %v901
    %950 = vmatpush.bf16.msra.mxu0 %v900
    %951 = vmatmul.bf16.gmra.mxu0 %v788
    %v952 = vpop.f32.mrf.mxu0
    %v953 = vadd.f32 %v934, %v952
    %v954 = vpop.f32.mrf.mxu0
    %v955 = vadd.f32 %v936, %v954
    %956 = vmatmul.bf16.gmra.mxu0 %v789
    %v957 = vpop.f32.mrf.mxu0
    %v958 = vadd.f32 %v939, %v957
    %v959 = vpop.f32.mrf.mxu0
    %v960 = vadd.f32 %v941, %v959
    %961 = vdwg.mxu0
    %v962 = vmax.f32 %v953, 0.0
    %v963 = vmax.f32 %v955, 0.0
    %v964 = vmax.f32 %v958, 0.0
    %v965 = vmax.f32 %v960, 0.0
    %v966 = vpack.c.bf16 %v962, %v962
    %v967 = vpack.c.bf16 %v963, %v963
    %v968 = vpack.c.bf16 %v964, %v964
    %v969 = vpack.c.bf16 %v965, %v965
    %970 = vst [vmem:[#allocation3 + $0x8] sm:$0xf] %v966
    %971 = vst [vmem:[#allocation3 + $0xc] sm:$0xf] %v967
    %972 = vst [vmem:[#allocation3 + $0x18] sm:$0xf] %v968
    %973 = vst [vmem:[#allocation3 + $0x1c] sm:$0xf] %v969
    %v974 = vld [vmem:[#allocation3 + $0x4] sm:$0x8]
    %v975 = vld [vmem:[#allocation3 + $0x8] sm:$0xf]
    %v976 = vld [vmem:[#allocation3 + $0xc] sm:$0x7]
    %v977 = vld [vmem:[#allocation3 + $0x14] sm:$0x8]
    %v978 = vld [vmem:[#allocation3 + $0x18] sm:$0xf]
    %v979 = vld [vmem:[#allocation3 + $0x1c] sm:$0x7]
    %v980 = vld [vmem:[#allocation3 + $0xc] sm:$0xf]
    %v981 = vld [vmem:[#allocation3 + $0x1c] sm:$0xf]
    %v988 = vunpack.c.l.b16 %v974
    %v989 = vunpack.c.l.b16 %v975
    %v990 = vunpack.c.l.b16 %v976
    %v991 = vunpack.c.l.b16 %v977
    %v992 = vunpack.c.l.b16 %v978
    %v993 = vunpack.c.l.b16 %v979
    %v994 = vpack.c.b16 %v989, %v988
    %v995 = vpack.c.b16 %v990, %v990
    %v996 = vpack.c.b16 %v992, %v991
    %v997 = vpack.c.b16 %v993, %v993
    %v1000 = vunpack.c.l.b16 %v980
    %v1001 = vunpack.c.l.b16 %v981
    %v1002 = vpack.c.b16 %v1000, %v989
    %v1003 = vpack.c.b16 %v1001, %v992
    %v1004 = vrot.slane %v1002, 5
    %v1005 = vrot.slane %v1003, 5
    %vm1006 = vcmask 1044480
    %v1007 = vrot.slane %v994, 3
    %v1008 = vrot.slane %v995, 3
    %v1009 = vsel %vm1006, %v1007, %v1008
    %v1010 = vrot.slane %v1004, 3
    %v1011 = vsel %vm1006, %v1010, %v1010
    %v1012 = vrot.slane %v996, 3
    %v1013 = vrot.slane %v997, 3
    %v1014 = vsel %vm1006, %v1012, %v1013
    %v1015 = vrot.slane %v1005, 3
    %v1016 = vsel %vm1006, %v1015, %v1015
    %v1021 = vld [vmem:[#allocation13] sm:$0xf]
    %v1022 = vld [vmem:[#allocation13 + $0x4] sm:$0xf]
    %v1023 = vld [vmem:[#allocation13 + $0x8] sm:$0xf]
    %v1024 = vld [vmem:[#allocation13 + $0xc] sm:$0xf]
    %v1025 = vld [vmem:[#allocation13 + $0x10] sm:$0xf]
    %v1026 = vld [vmem:[#allocation13 + $0x14] sm:$0xf]
    %v1027 = vld [vmem:[#allocation13 + $0x18] sm:$0xf]
    %v1028 = vld [vmem:[#allocation13 + $0x1c] sm:$0xf]
    %v1029 = vld [vmem:[#allocation13 + $0x20] sm:$0xf]
    %v1030 = vld [vmem:[#allocation13 + $0x24] sm:$0xf]
    %v1031 = vld [vmem:[#allocation13 + $0x28] sm:$0xf]
    %v1032 = vld [vmem:[#allocation13 + $0x2c] sm:$0xf]
    %v1033 = vld [vmem:[#allocation13 + $0x30] sm:$0xf]
    %v1034 = vld [vmem:[#allocation13 + $0x34] sm:$0xf]
    %v1035 = vld [vmem:[#allocation13 + $0x38] sm:$0xf]
    %v1036 = vld [vmem:[#allocation13 + $0x3c] sm:$0xf]
    %v1037 = vld [vmem:[#allocation13 + $0x40] sm:$0xf]
    %v1038 = vld [vmem:[#allocation13 + $0x44] sm:$0xf]
    %v1039 = vld [vmem:[#allocation13 + $0x48] sm:$0xf]
    %v1040 = vld [vmem:[#allocation13 + $0x4c] sm:$0xf]
    %v1041 = vld [vmem:[#allocation13 + $0x50] sm:$0xf]
    %v1042 = vld [vmem:[#allocation13 + $0x54] sm:$0xf]
    %v1043 = vld [vmem:[#allocation13 + $0x58] sm:$0xf]
    %v1044 = vld [vmem:[#allocation13 + $0x5c] sm:$0xf]
    %v1045 = vld [vmem:[#allocation13 + $0x60] sm:$0xf]
    %v1046 = vld [vmem:[#allocation13 + $0x64] sm:$0xf]
    %v1047 = vld [vmem:[#allocation13 + $0x68] sm:$0xf]
    %v1048 = vld [vmem:[#allocation13 + $0x6c] sm:$0xf]
    %v1049 = vld [vmem:[#allocation13 + $0x70] sm:$0xf]
    %v1050 = vld [vmem:[#allocation13 + $0x74] sm:$0xf]
    %v1051 = vld [vmem:[#allocation13 + $0x78] sm:$0xf]
    %v1052 = vld [vmem:[#allocation13 + $0x7c] sm:$0xf]
    %v1053 = vld [vmem:[%s10] sm:$0x1]
    %v1055 = vperm.slane %v1053, 0
    %v1089 = vunpack.c.l.b16 %v1021
    %v1090 = vunpack.c.l.b16 %v1022
    %v1091 = vunpack.c.l.b16 %v1023
    %v1092 = vunpack.c.l.b16 %v1024
    %v1093 = vunpack.c.l.b16 %v1025
    %v1094 = vunpack.c.l.b16 %v1026
    %v1095 = vunpack.c.l.b16 %v1027
    %v1096 = vunpack.c.l.b16 %v1028
    %v1097 = vunpack.c.l.b16 %v1029
    %v1098 = vunpack.c.l.b16 %v1030
    %v1099 = vunpack.c.l.b16 %v1031
    %v1100 = vunpack.c.l.b16 %v1032
    %v1101 = vunpack.c.l.b16 %v1033
    %v1102 = vunpack.c.l.b16 %v1034
    %v1103 = vunpack.c.l.b16 %v1035
    %v1104 = vunpack.c.l.b16 %v1036
    %v1105 = vunpack.c.l.b16 %v1037
    %v1106 = vunpack.c.l.b16 %v1038
    %v1107 = vunpack.c.l.b16 %v1039
    %v1108 = vunpack.c.l.b16 %v1040
    %v1109 = vunpack.c.l.b16 %v1041
    %v1110 = vunpack.c.l.b16 %v1042
    %v1111 = vunpack.c.l.b16 %v1043
    %v1112 = vunpack.c.l.b16 %v1044
    %v1113 = vunpack.c.l.b16 %v1045
    %v1114 = vunpack.c.l.b16 %v1046
    %v1115 = vunpack.c.l.b16 %v1047
    %v1116 = vunpack.c.l.b16 %v1048
    %v1117 = vunpack.c.l.b16 %v1049
    %v1118 = vunpack.c.l.b16 %v1050
    %v1119 = vunpack.c.l.b16 %v1051
    %v1120 = vunpack.c.l.b16 %v1052
    %v1121 = vpack.c.b16 %v1090, %v1089
    %v1122 = vpack.c.b16 %v1092, %v1091
    %v1123 = vpack.c.b16 %v1094, %v1093
    %v1124 = vpack.c.b16 %v1096, %v1095
    %v1125 = vpack.c.b16 %v1098, %v1097
    %v1126 = vpack.c.b16 %v1100, %v1099
    %v1127 = vpack.c.b16 %v1102, %v1101
    %v1128 = vpack.c.b16 %v1104, %v1103
    %v1129 = vpack.c.b16 %v1106, %v1105
    %v1130 = vpack.c.b16 %v1108, %v1107
    %v1131 = vpack.c.b16 %v1110, %v1109
    %v1132 = vpack.c.b16 %v1112, %v1111
    %v1133 = vpack.c.b16 %v1114, %v1113
    %v1134 = vpack.c.b16 %v1116, %v1115
    %v1135 = vpack.c.b16 %v1118, %v1117
    %v1136 = vpack.c.b16 %v1120, %v1119
    %1153 = vmatpush.bf16.msra.mxu0 %v1128
    %1154 = vmatpush.bf16.msra.mxu0 %v1127
    %1155 = vmatpush.bf16.msra.mxu0 %v1126
    %1156 = vmatpush.bf16.msra.mxu0 %v1125
    %1157 = vmatpush.bf16.msra.mxu0 %v1124
    %1158 = vmatpush.bf16.msra.mxu0 %v1123
    %1159 = vmatpush.bf16.msra.mxu0 %v1122
    %1160 = vmatpush.bf16.msra.mxu0 %v1121
    %1161 = vmatmul.bf16.gmra.mxu0 %v1009
    %v1162 = vpop.f32.mrf.mxu0
    %v1163 = vadd.f32 %v1055, %v1162
    %v1164 = vpop.f32.mrf.mxu0
    %v1165 = vadd.f32 %v1055, %v1164
    %1166 = vmatmul.bf16.gmra.mxu0 %v1014
    %v1167 = vpop.f32.mrf.mxu0
    %v1168 = vadd.f32 %v1055, %v1167
    %v1169 = vpop.f32.mrf.mxu0
    %v1170 = vadd.f32 %v1055, %v1169
    %1171 = vdwg.mxu0
    %1172 = vmatpush.bf16.msra.mxu0 %v1136
    %1173 = vmatpush.bf16.msra.mxu0 %v1135
    %1174 = vmatpush.bf16.msra.mxu0 %v1134
    %1175 = vmatpush.bf16.msra.mxu0 %v1133
    %1176 = vmatpush.bf16.msra.mxu0 %v1132
    %1177 = vmatpush.bf16.msra.mxu0 %v1131
    %1178 = vmatpush.bf16.msra.mxu0 %v1130
    %1179 = vmatpush.bf16.msra.mxu0 %v1129
    %1180 = vmatmul.bf16.gmra.mxu0 %v1011
    %v1181 = vpop.f32.mrf.mxu0
    %v1182 = vadd.f32 %v1163, %v1181
    %v1183 = vpop.f32.mrf.mxu0
    %v1184 = vadd.f32 %v1165, %v1183
    %1185 = vmatmul.bf16.gmra.mxu0 %v1016
    %v1186 = vpop.f32.mrf.mxu0
    %v1187 = vadd.f32 %v1168, %v1186
    %v1188 = vpop.f32.mrf.mxu0
    %v1189 = vadd.f32 %v1170, %v1188
    %1190 = vdwg.mxu0
    %v1191 = vmax.f32 %v1182, 0.0
    %v1192 = vmax.f32 %v1184, 0.0
    %v1193 = vmax.f32 %v1187, 0.0
    %v1194 = vmax.f32 %v1189, 0.0
    %v1195 = vld [vmem:[#allocation2 + $0x10] sm:$0xff]
    %v1196 = vld [vmem:[#allocation2 + $0x18] sm:$0xff]
    %v1197 = vld [vmem:[#allocation2 + $0x30] sm:$0xff]
    %v1198 = vld [vmem:[#allocation2 + $0x38] sm:$0xff]
    %v1199 = vadd.f32 %v1191, %v1195
    %v1200 = vadd.f32 %v1192, %v1196
    %v1201 = vadd.f32 %v1193, %v1197
    %v1202 = vadd.f32 %v1194, %v1198
    %v1203 = vmax.f32 %v1199, 0.0
    %v1204 = vmax.f32 %v1200, 0.0
    %v1205 = vmax.f32 %v1201, 0.0
    %v1206 = vmax.f32 %v1202, 0.0
    %1207 = vst [vmem:[#allocation15] sm:$0xff] %v1203
    %1208 = vst [vmem:[#allocation15 + $0x8] sm:$0xff] %v1204
    %1209 = vst [vmem:[#allocation15 + $0x10] sm:$0xff] %v1205
    %1210 = vst [vmem:[#allocation15 + $0x18] sm:$0xff] %v1206
    // Predicated region
    $region70: #{tpu_custom_call.1} parent=1 // pred_check
      _
    $region71: #{tpu_custom_call.1} parent=1 // pred_check_branch
      %1212 = sbr.rel (0) target = $region73
    $region72: #{tpu_custom_call.1} parent=1 // pred_region
      %1214 = vsyncadd [#allocation6], 0
      %s1215 = sshll.u32 [#allocation15], 4
      %s1216 = int_to_ptr.vmem [resolvable:$true] %s1215
      %s1217 = sshll.u32 %s11, 4
      %s1218 = int_to_ptr.hbm [resolvable:$true] %s1217
      %1223 = dma.vmem_to_hbm [thread:$0]  %s1216, 512, %s1218, [#allocation6], 128, 128, 8
    $region73: #{tpu_custom_call.1} parent=1 // pred_fallthru
      _
    // Predicated region
    $region74: #{tpu_custom_call.1} parent=1 // pred_check
      _
    $region75: #{tpu_custom_call.1} parent=1 // pred_check_branch
      %1225 = sbr.rel (0) target = $region77
    $region76: #{tpu_custom_call.1} parent=1 // pred_region
      %1227 = dma.done [#allocation6], 512
    $region77: #{tpu_custom_call.1} parent=1 // pred_fallthru
      _
    %1228 = vsyncpa [#allocation5], 1
    %1229 = vsyncpa [#allocation8], 1
    %1230 = vsyncpa [#allocation11], 1
    %1231 = vsyncpa [#allocation14], 1
    %1232 = vsyncpa [#allocation6], 1

</llo_original>
